<compile_context>
chip_gen: v7x
topology: tpu7x:2x2x1
jax: 0.10.0
libtpu: 0.0.40
codegen_flags: <defaults>
</compile_context>

<pallas_src>
import jax
import jax.numpy as jnp
from jax import lax
from jax.experimental import pallas as pl
from jax.experimental.pallas import tpu as pltpu

_BN_EPS = 1e-5           # torch BatchNorm1d default
_MSG_EPS = 1e-7          # GENConv eps
_SOFTMAX_EPS = 1e-16     # PyG softmax denominator epsilon
_NEG_BIG = -(2.0 ** 120)  # exactly representable f32 sentinel
_LANE = 128

# packed small-parameter row layout: one [8, dpad] tile per layer
_ROW_PRE_SCALE, _ROW_PRE_SHIFT = 0, 1     # DeepGCN pre-BN (folded), skip layers only
_ROW_B_SRC, _ROW_B_DST = 2, 3             # lin_src / lin_dst biases, layer 0 only
_ROW_B1, _ROW_B2, _ROW_T = 4, 5, 6        # MLP biases (BN folded) + softmax t
_N_ROWS = 8

_CONTRACT_DIM0 = (((0,), (0,)), ((), ()))  # contract dim 0 of both operands


def _round_up(v, m):
    return (v + m - 1) // m * m


def _pad2(a, rows, cols):
    return jnp.pad(a, ((0, rows - a.shape[0]), (0, cols - a.shape[1])))


def _fused_genconv_kernel(x_ref, st_ref, d_ref, ef_ref, sp_ref, wsrc_ref, wdst_ref,
                          w1_ref, w2_ref, o_ref,
                          xsrc_ref, xdst_ref, m_ref, l_ref, acc_ref):
    """grid = (layer, edge_tile); o_ref is the resident inter-layer carry."""
    lyr = pl.program_id(0)
    ei = pl.program_id(1)
    sp = sp_ref[...]                      # [8, dpad] packed per-layer params

    @pl.when(ei == 0)
    def _init():
        @pl.when(lyr == 0)
        def _first_layer():
            x = x_ref[...]
            xsrc_ref[...] = (jnp.dot(x, wsrc_ref[...],
                                     preferred_element_type=jnp.float32)
                             + sp[_ROW_B_SRC:_ROW_B_SRC + 1, :])
            xdst_ref[...] = (jnp.dot(x, wdst_ref[...],
                                     preferred_element_type=jnp.float32)
                             + sp[_ROW_B_DST:_ROW_B_DST + 1, :])
            o_ref[...] = jnp.zeros_like(o_ref)     # layer 0 has no residual

        @pl.when(lyr > 0)
        def _skip_layer():
            # DeepGCN 'res+' pre-block: BN(eval, folded) -> ReLU -> Dropout(eval=id)
            h = o_ref[...]                          # previous layer output (resident)
            hh = jnp.maximum(h * sp[_ROW_PRE_SCALE:_ROW_PRE_SCALE + 1, :]
                             + sp[_ROW_PRE_SHIFT:_ROW_PRE_SHIFT + 1, :], 0.0)
            xsrc_ref[...] = hh                      # identity lin_src
            xdst_ref[...] = hh                      # identity lin_dst

        m_ref[...] = jnp.full_like(m_ref, _NEG_BIG)
        l_ref[...] = jnp.zeros_like(l_ref)
        acc_ref[...] = jnp.zeros_like(acc_ref)

    # ---- per-edge-tile messages + online scatter-softmax (per-channel frame) ----
    st_t = st_ref[...]            # [N, TE] 0/1 src incidence
    d_t = d_ref[...]              # [N, TE] 0/1 dst incidence (zero cols for padding)
    e_feat = ef_ref[...]          # [TE, dpad] precomputed lin_edge(edge_attr)

    # gather x_j = x_src[src(e)]: contract over the node axis on the MXU
    x_j = lax.dot_general(st_t, xsrc_ref[...], _CONTRACT_DIM0,
                          preferred_element_type=jnp.float32)        # [TE, dpad]
    msg = jnp.maximum(x_j + e_feat, 0.0) + _MSG_EPS
    z = msg * sp[_ROW_T:_ROW_T + 1, :]                               # t * msg

    # softmax is shift-invariant: a per-channel running max is a valid frame, so
    # no [N, TE, C] per-destination slab and no frame-gather matmul are needed.
    m_old = m_ref[...]                                               # [1, dpad]
    m_new = jnp.maximum(m_old, jnp.max(z, axis=0, keepdims=True))
    corr = jnp.exp(m_old - m_new)
    p = jnp.exp(z - m_new)                                           # <= 1 everywhere
    pm = p * msg

    # scatter-add via D @ (.): padded edges have all-zero incidence columns
    l_t = jnp.dot(d_t, p, preferred_element_type=jnp.float32)        # [N, dpad]
    a_t = jnp.dot(d_t, pm, preferred_element_type=jnp.float32)

    m_ref[...] = m_new
    l_ref[...] = corr * l_ref[...] + l_t
    acc_ref[...] = corr * acc_ref[...] + a_t

    @pl.when(ei == pl.num_programs(1) - 1)
    def _finalize():
        inv = pl.reciprocal(l_ref[...] + _SOFTMAX_EPS, approx=True)
        out = acc_ref[...] * inv + xdst_ref[...]
        # GENConv MLP: Linear -> BatchNorm(eval, folded into W1/b1) -> ReLU -> Linear
        h1 = jnp.maximum(jnp.dot(out, w1_ref[...],
                                 preferred_element_type=jnp.float32)
                         + sp[_ROW_B1:_ROW_B1 + 1, :], 0.0)
        co = (jnp.dot(h1, w2_ref[...], preferred_element_type=jnp.float32)
              + sp[_ROW_B2:_ROW_B2 + 1, :])
        # layer 0: o_ref was zero-initialized -> co; skip layers: 'res+' residual add.
        o_ref[...] = o_ref[...] + co


def _prep_layer_params(p, *, in_dim, out_dim, dpad, e_pad, has_lin, res_plus,
                       edge_attr):
    """Fold eval-mode BatchNorms, pack small params, precompute lin_edge features."""
    hidden = p["W1"].shape[1]
    small = jnp.zeros((_N_ROWS, dpad), jnp.float32)
    if res_plus:
        scale = p["pre_bn_gamma"][0] * jax.lax.rsqrt(p["pre_bn_var"][0] + _BN_EPS)
        shift = p["pre_bn_beta"][0] - p["pre_bn_mean"][0] * scale
        small = small.at[_ROW_PRE_SCALE, :in_dim].set(scale)
        small = small.at[_ROW_PRE_SHIFT, :in_dim].set(shift)
    if has_lin:
        small = small.at[_ROW_B_SRC, :out_dim].set(p["b_src"][0])
        small = small.at[_ROW_B_DST, :out_dim].set(p["b_dst"][0])
    s1 = p["bn_gamma"][0] * jax.lax.rsqrt(p["bn_var"][0] + _BN_EPS)
    b1f = p["b1"][0] * s1 + (p["bn_beta"][0] - p["bn_mean"][0] * s1)
    w1f = p["W1"] * s1[None, :]
    small = small.at[_ROW_B1, :hidden].set(b1f)
    small = small.at[_ROW_B2, :out_dim].set(p["b2"][0])
    small = small.at[_ROW_T, :].set(p["t"][0, 0])

    # lane-dense lin_edge(edge_attr): [E_pad, dpad]; phantom rows / lanes are zero
    e = edge_attr.shape[0]
    ef = edge_attr.astype(jnp.float32) @ p["W_edge"] + p["b_edge"]
    ef = jnp.pad(ef, ((0, e_pad - e), (0, dpad - out_dim)))

    prep = {"small": small, "ef": ef,
            "W1": _pad2(w1f, dpad, dpad), "W2": _pad2(p["W2"], dpad, dpad)}
    if has_lin:
        prep["W_src"] = _pad2(p["W_src"], dpad, dpad)
        prep["W_dst"] = _pad2(p["W_dst"], dpad, dpad)
    else:
        prep["W_src"] = jnp.eye(dpad, dtype=jnp.float32)
        prep["W_dst"] = jnp.eye(dpad, dtype=jnp.float32)
    return prep


def genconv_block_forward(x, edge_index, edge_weight, first_params, skip_params_list,
                          *, input_dim, output_dim, edge_dim, edge_tile=512):
    """GENConvBlock.forward(x, edge_index, edge_weight) (eval-mode semantics)."""
    assert edge_weight.shape[1] == edge_dim
    n = x.shape[0]
    e = edge_index.shape[1]
    n_layers = 1 + len(skip_params_list)
    dpad = _round_up(max(input_dim, output_dim, 2 * output_dim), _LANE)
    te = min(edge_tile, _round_up(max(e, 1), _LANE))
    e_pad = _round_up(max(e, 1), te)
    n_tiles = e_pad // te

    # node-major 0/1 incidence matrices (edges on lanes), tiled along E.
    # TODO(synk): for large graphs replace with a scalar-prefetch row gather/scatter.
    nodes = jnp.arange(n, dtype=jnp.int32)[:, None]
    st = jnp.pad((nodes == edge_index[0][None, :]).astype(jnp.float32),
                 ((0, 0), (0, e_pad - e)))
    d = jnp.pad((nodes == edge_index[1][None, :]).astype(jnp.float32),
                ((0, 0), (0, e_pad - e)))
    x_pad = jnp.pad(x.astype(jnp.float32), ((0, 0), (0, dpad - input_dim)))

    has_lin_first = input_dim != output_dim
    preps = [_prep_layer_params(first_params, in_dim=input_dim, out_dim=output_dim,
                                dpad=dpad, e_pad=e_pad, has_lin=has_lin_first,
                                res_plus=False, edge_attr=edge_weight)]
    for p in skip_params_list:
        preps.append(_prep_layer_params(p, in_dim=output_dim, out_dim=output_dim,
                                        dpad=dpad, e_pad=e_pad, has_lin=False,
                                        res_plus=True, edge_attr=edge_weight))

    small = jnp.stack([pp["small"] for pp in preps])   # [L, 8, dpad]
    ef = jnp.stack([pp["ef"] for pp in preps])         # [L, E_pad, dpad]
    w1 = jnp.stack([pp["W1"] for pp in preps])         # [L, dpad, dpad]
    w2 = jnp.stack([pp["W2"] for pp in preps])         # [L, dpad, dpad]
    wsrc, wdst = preps[0]["W_src"], preps[0]["W_dst"]  # layer 0 only

    out = pl.pallas_call(
        _fused_genconv_kernel,
        out_shape=jax.ShapeDtypeStruct((n, dpad), jnp.float32),
        grid=(n_layers, n_tiles),
        in_specs=[
            pl.BlockSpec((n, dpad), lambda li, ei: (0, 0)),               # x
            pl.BlockSpec((n, te), lambda li, ei: (0, ei)),                # src incidence
            pl.BlockSpec((n, te), lambda li, ei: (0, ei)),                # dst incidence
            pl.BlockSpec((None, te, dpad), lambda li, ei: (li, ei, 0)),   # lin_edge feats
            pl.BlockSpec((None, _N_ROWS, dpad), lambda li, ei: (li, 0, 0)),  # small params
            pl.BlockSpec((dpad, dpad), lambda li, ei: (0, 0)),            # W_src (layer 0)
            pl.BlockSpec((dpad, dpad), lambda li, ei: (0, 0)),            # W_dst (layer 0)
            pl.BlockSpec((None, dpad, dpad), lambda li, ei: (li, 0, 0)),  # W1 (BN folded)
            pl.BlockSpec((None, dpad, dpad), lambda li, ei: (li, 0, 0)),  # W2
        ],
        out_specs=pl.BlockSpec((n, dpad), lambda li, ei: (0, 0)),
        scratch_shapes=[pltpu.VMEM((n, dpad), jnp.float32),   # xsrc: lin_src / relu(BN)
                        pltpu.VMEM((n, dpad), jnp.float32),   # xdst: lin_dst / identity
                        pltpu.VMEM((1, dpad), jnp.float32),   # running per-channel max
                        pltpu.VMEM((n, dpad), jnp.float32),   # softmax denominator
                        pltpu.VMEM((n, dpad), jnp.float32)],  # weighted message sum
        compiler_params=pltpu.CompilerParams(
            dimension_semantics=("arbitrary", "arbitrary"),
            vmem_limit_bytes=32 * 1024 * 1024),
    )(x_pad, st, d, ef, small, wsrc, wdst, w1, w2)
    return out[:, :output_dim]


def init_genconv_params(key, in_dim, out_dim, edge_dim, *,
                        has_lin_src, has_lin_dst, res_plus):
    hidden = 2 * out_dim  # GENConv MLP: expansion=2, num_layers=2
    keys = jax.random.split(key, 8)

    def w(k, shape):
        return jax.random.normal(k, shape, jnp.float32) * (1.0 / (shape[0] ** 0.5))

    p = {}
    if res_plus:
        p["pre_bn_gamma"] = jnp.ones((1, in_dim), jnp.float32)
        p["pre_bn_beta"] = jnp.zeros((1, in_dim), jnp.float32)
        p["pre_bn_mean"] = jnp.zeros((1, in_dim), jnp.float32)
        p["pre_bn_var"] = jnp.ones((1, in_dim), jnp.float32)
    if has_lin_src:
        p["W_src"] = w(keys[0], (in_dim, out_dim))
        p["b_src"] = jnp.zeros((1, out_dim), jnp.float32)
    p["W_edge"] = w(keys[1], (edge_dim, out_dim))
    p["b_edge"] = jnp.zeros((1, out_dim), jnp.float32)
    if has_lin_dst:
        p["W_dst"] = w(keys[2], (in_dim, out_dim))
        p["b_dst"] = jnp.zeros((1, out_dim), jnp.float32)
    p["t"] = jnp.ones((1, 1), jnp.float32)  # SoftmaxAggregation learnable t
    p["W1"] = w(keys[3], (out_dim, hidden))
    p["b1"] = jnp.zeros((1, hidden), jnp.float32)
    p["bn_gamma"] = jnp.ones((1, hidden), jnp.float32)
    p["bn_beta"] = jnp.zeros((1, hidden), jnp.float32)
    p["bn_mean"] = jnp.zeros((1, hidden), jnp.float32)
    p["bn_var"] = jnp.ones((1, hidden), jnp.float32)
    p["W2"] = w(keys[4], (hidden, out_dim))
    p["b2"] = jnp.zeros((1, out_dim), jnp.float32)
    return p


if __name__ == "__main__":
    key = jax.random.PRNGKey(0)
    N, E = 24, 160
    input_dim, output_dim, edge_dim, n_skip_layers = 8, 16, 2, 2

    k_x, k_ei, k_ew, k_p = jax.random.split(key, 4)
    x = jax.random.normal(k_x, (N, input_dim), jnp.float32)
    edge_index = jax.random.randint(k_ei, (2, E), 0, N)
    edge_weight = jax.random.normal(k_ew, (E, edge_dim), jnp.float32)

    pkeys = jax.random.split(k_p, 1 + n_skip_layers)
    first_params = init_genconv_params(
        pkeys[0], input_dim, output_dim, edge_dim,
        has_lin_src=True, has_lin_dst=True, res_plus=False)
    skip_params = [
        init_genconv_params(pkeys[1 + i], output_dim, output_dim, edge_dim,
                            has_lin_src=False, has_lin_dst=False, res_plus=True)
        for i in range(n_skip_layers)
    ]

    out = genconv_block_forward(x, edge_index, edge_weight, first_params, skip_params,
                                input_dim=input_dim, output_dim=output_dim,
                                edge_dim=edge_dim)
    out = jax.block_until_ready(out)

    assert out.shape == (N, output_dim), out.shape
    assert bool(jnp.all(jnp.isfinite(out)))
    print("KERNEL_OK")
</pallas_src>

<mosaic_0001>
module attributes {stable_mosaic.version = 11 : i64} {
  func.func @_fused_genconv_kernel(%arg0: i32, %arg1: i32, %arg2: memref<24x128xf32, #tpu.memory_space<vmem>>, %arg3: memref<24x256xf32, #tpu.memory_space<vmem>>, %arg4: memref<24x256xf32, #tpu.memory_space<vmem>>, %arg5: memref<1x256x128xf32, #tpu.memory_space<vmem>>, %arg6: memref<1x8x128xf32, #tpu.memory_space<vmem>>, %arg7: memref<128x128xf32, #tpu.memory_space<vmem>>, %arg8: memref<128x128xf32, #tpu.memory_space<vmem>>, %arg9: memref<1x128x128xf32, #tpu.memory_space<vmem>>, %arg10: memref<1x128x128xf32, #tpu.memory_space<vmem>>, %arg11: memref<24x128xf32, #tpu.memory_space<vmem>>, %arg12: memref<24x128xf32, #tpu.memory_space<vmem>>, %arg13: memref<24x128xf32, #tpu.memory_space<vmem>>, %arg14: memref<1x128xf32, #tpu.memory_space<vmem>>, %arg15: memref<24x128xf32, #tpu.memory_space<vmem>>, %arg16: memref<24x128xf32, #tpu.memory_space<vmem>>) attributes {dimension_semantics = [#tpu.dimension_semantics<arbitrary>, #tpu.dimension_semantics<arbitrary>], iteration_bounds = array<i64: 3, 1>, scalar_prefetch = 0 : i64, scratch_operands = 5 : i64, tpu.core_type = #tpu.core_type<tc>, window_params = [{pipeline_mode = #tpu.pipeline_mode<synchronous>, transform_indices = @transform_0, window_bounds = array<i64: 24, 128>}, {transform_indices = @transform_1, window_bounds = array<i64: 24, 256>}, {transform_indices = @transform_2, window_bounds = array<i64: 24, 256>}, {transform_indices = @transform_3, window_bounds = array<i64: 1, 256, 128>}, {transform_indices = @transform_4, window_bounds = array<i64: 1, 8, 128>}, {pipeline_mode = #tpu.pipeline_mode<synchronous>, transform_indices = @transform_5, window_bounds = array<i64: 128, 128>}, {pipeline_mode = #tpu.pipeline_mode<synchronous>, transform_indices = @transform_6, window_bounds = array<i64: 128, 128>}, {transform_indices = @transform_7, window_bounds = array<i64: 1, 128, 128>}, {transform_indices = @transform_8, window_bounds = array<i64: 1, 128, 128>}, {pipeline_mode = #tpu.pipeline_mode<synchronous>, transform_indices = @transform_9, window_bounds = array<i64: 24, 128>}]} {
    %c0 = arith.constant 0 : index
    %c0_0 = arith.constant 0 : index
    %c0_1 = arith.constant 0 : index
    %0 = vector.load %arg6[%c0, %c0_0, %c0_1] : memref<1x8x128xf32, #tpu.memory_space<vmem>>, vector<1x8x128xf32>
    %1 = vector.shape_cast %0 : vector<1x8x128xf32> to vector<8x128xf32>
    %c0_i32 = arith.constant 0 : i32
    %2 = arith.cmpi eq, %arg1, %c0_i32 : i32
    %3 = arith.extui %2 : i1 to i32
    %c0_i32_2 = arith.constant 0 : i32
    %4 = arith.cmpi ne, %3, %c0_i32_2 : i32
    scf.if %4 {
      %c0_i32_31 = arith.constant 0 : i32
      %45 = arith.cmpi eq, %arg0, %c0_i32_31 : i32
      %46 = arith.extui %45 : i1 to i32
      %c0_i32_32 = arith.constant 0 : i32
      %47 = arith.cmpi ne, %46, %c0_i32_32 : i32
      scf.if %47 {
        %c0_44 = arith.constant 0 : index
        %c0_45 = arith.constant 0 : index
        %57 = vector.load %arg2[%c0_44, %c0_45] : memref<24x128xf32, #tpu.memory_space<vmem>>, vector<24x128xf32>
        %c0_46 = arith.constant 0 : index
        %c0_47 = arith.constant 0 : index
        %58 = vector.load %arg7[%c0_46, %c0_47] : memref<128x128xf32, #tpu.memory_space<vmem>>, vector<128x128xf32>
        %cst_48 = arith.constant dense<0.000000e+00> : vector<24x128xf32>
        %59 = tpu.matmul %57, %58, %cst_48 {dimension_numbers = #tpu.dot_dimension_numbers<[1], [0], [0], [1], [0, 0, 1, 1], [], []>} : vector<24x128xf32>, vector<128x128xf32>, vector<24x128xf32> -> vector<24x128xf32>
        %60 = vector.extract_strided_slice %1 {offsets = [2, 0], sizes = [1, 128], strides = [1, 1]} : vector<8x128xf32> to vector<1x128xf32>
        %61 = vector.broadcast %60 : vector<1x128xf32> to vector<24x128xf32>
        %62 = arith.addf %59, %61 : vector<24x128xf32>
        %c0_49 = arith.constant 0 : index
        %c0_50 = arith.constant 0 : index
        %63 = vector.load %arg12[%c0_49, %c0_50] : memref<24x128xf32, #tpu.memory_space<vmem>>, vector<24x128xf32>
        tpu.vector_store %arg12[%c0_49, %c0_50], %62 {strides = array<i32>} : memref<24x128xf32, #tpu.memory_space<vmem>>, vector<24x128xf32>,
        %c0_51 = arith.constant 0 : index
        %c0_52 = arith.constant 0 : index
        %64 = vector.load %arg8[%c0_51, %c0_52] : memref<128x128xf32, #tpu.memory_space<vmem>>, vector<128x128xf32>
        %cst_53 = arith.constant dense<0.000000e+00> : vector<24x128xf32>
        %65 = tpu.matmul %57, %64, %cst_53 {dimension_numbers = #tpu.dot_dimension_numbers<[1], [0], [0], [1], [0, 0, 1, 1], [], []>} : vector<24x128xf32>, vector<128x128xf32>, vector<24x128xf32> -> vector<24x128xf32>
        %66 = vector.extract_strided_slice %1 {offsets = [3, 0], sizes = [1, 128], strides = [1, 1]} : vector<8x128xf32> to vector<1x128xf32>
        %67 = vector.broadcast %66 : vector<1x128xf32> to vector<24x128xf32>
        %68 = arith.addf %65, %67 : vector<24x128xf32>
        %c0_54 = arith.constant 0 : index
        %c0_55 = arith.constant 0 : index
        %69 = vector.load %arg13[%c0_54, %c0_55] : memref<24x128xf32, #tpu.memory_space<vmem>>, vector<24x128xf32>
        tpu.vector_store %arg13[%c0_54, %c0_55], %68 {strides = array<i32>} : memref<24x128xf32, #tpu.memory_space<vmem>>, vector<24x128xf32>,
        %cst_56 = arith.constant 0.000000e+00 : f32
        %70 = vector.broadcast %cst_56 : f32 to vector<24x128xf32>
        %c0_57 = arith.constant 0 : index
        %c0_58 = arith.constant 0 : index
        %71 = vector.load %arg11[%c0_57, %c0_58] : memref<24x128xf32, #tpu.memory_space<vmem>>, vector<24x128xf32>
        tpu.vector_store %arg11[%c0_57, %c0_58], %70 {strides = array<i32>} : memref<24x128xf32, #tpu.memory_space<vmem>>, vector<24x128xf32>,
      } else {
      }
      %c0_i32_33 = arith.constant 0 : i32
      %48 = arith.cmpi sgt, %arg0, %c0_i32_33 : i32
      %49 = arith.extui %48 : i1 to i32
      %c0_i32_34 = arith.constant 0 : i32
      %50 = arith.cmpi ne, %49, %c0_i32_34 : i32
      scf.if %50 {
        %c0_44 = arith.constant 0 : index
        %c0_45 = arith.constant 0 : index
        %57 = vector.load %arg11[%c0_44, %c0_45] : memref<24x128xf32, #tpu.memory_space<vmem>>, vector<24x128xf32>
        %58 = vector.extract_strided_slice %1 {offsets = [0, 0], sizes = [1, 128], strides = [1, 1]} : vector<8x128xf32> to vector<1x128xf32>
        %59 = vector.broadcast %58 : vector<1x128xf32> to vector<24x128xf32>
        %60 = arith.mulf %57, %59 : vector<24x128xf32>
        %61 = vector.extract_strided_slice %1 {offsets = [1, 0], sizes = [1, 128], strides = [1, 1]} : vector<8x128xf32> to vector<1x128xf32>
        %62 = vector.broadcast %61 : vector<1x128xf32> to vector<24x128xf32>
        %63 = arith.addf %60, %62 : vector<24x128xf32>
        %cst_46 = arith.constant 0.000000e+00 : f32
        %64 = vector.broadcast %cst_46 : f32 to vector<24x128xf32>
        %65 = arith.maximumf %63, %64 : vector<24x128xf32>
        %c0_47 = arith.constant 0 : index
        %c0_48 = arith.constant 0 : index
        %66 = vector.load %arg12[%c0_47, %c0_48] : memref<24x128xf32, #tpu.memory_space<vmem>>, vector<24x128xf32>
        tpu.vector_store %arg12[%c0_47, %c0_48], %65 {strides = array<i32>} : memref<24x128xf32, #tpu.memory_space<vmem>>, vector<24x128xf32>,
        %c0_49 = arith.constant 0 : index
        %c0_50 = arith.constant 0 : index
        %67 = vector.load %arg13[%c0_49, %c0_50] : memref<24x128xf32, #tpu.memory_space<vmem>>, vector<24x128xf32>
        tpu.vector_store %arg13[%c0_49, %c0_50], %65 {strides = array<i32>} : memref<24x128xf32, #tpu.memory_space<vmem>>, vector<24x128xf32>,
      } else {
      }
      %cst_35 = arith.constant -1.329228E+36 : f32
      %51 = vector.broadcast %cst_35 : f32 to vector<1x128xf32>
      %c0_36 = arith.constant 0 : index
      %c0_37 = arith.constant 0 : index
      %52 = vector.load %arg14[%c0_36, %c0_37] : memref<1x128xf32, #tpu.memory_space<vmem>>, vector<1x128xf32>
      tpu.vector_store %arg14[%c0_36, %c0_37], %51 {strides = array<i32>} : memref<1x128xf32, #tpu.memory_space<vmem>>, vector<1x128xf32>,
      %cst_38 = arith.constant 0.000000e+00 : f32
      %53 = vector.broadcast %cst_38 : f32 to vector<24x128xf32>
      %c0_39 = arith.constant 0 : index
      %c0_40 = arith.constant 0 : index
      %54 = vector.load %arg15[%c0_39, %c0_40] : memref<24x128xf32, #tpu.memory_space<vmem>>, vector<24x128xf32>
      tpu.vector_store %arg15[%c0_39, %c0_40], %53 {strides = array<i32>} : memref<24x128xf32, #tpu.memory_space<vmem>>, vector<24x128xf32>,
      %cst_41 = arith.constant 0.000000e+00 : f32
      %55 = vector.broadcast %cst_41 : f32 to vector<24x128xf32>
      %c0_42 = arith.constant 0 : index
      %c0_43 = arith.constant 0 : index
      %56 = vector.load %arg16[%c0_42, %c0_43] : memref<24x128xf32, #tpu.memory_space<vmem>>, vector<24x128xf32>
      tpu.vector_store %arg16[%c0_42, %c0_43], %55 {strides = array<i32>} : memref<24x128xf32, #tpu.memory_space<vmem>>, vector<24x128xf32>,
    } else {
    }
    %c0_3 = arith.constant 0 : index
    %c0_4 = arith.constant 0 : index
    %5 = vector.load %arg3[%c0_3, %c0_4] : memref<24x256xf32, #tpu.memory_space<vmem>>, vector<24x256xf32>
    %c0_5 = arith.constant 0 : index
    %c0_6 = arith.constant 0 : index
    %6 = vector.load %arg4[%c0_5, %c0_6] : memref<24x256xf32, #tpu.memory_space<vmem>>, vector<24x256xf32>
    %c0_7 = arith.constant 0 : index
    %c0_8 = arith.constant 0 : index
    %c0_9 = arith.constant 0 : index
    %7 = vector.load %arg5[%c0_7, %c0_8, %c0_9] : memref<1x256x128xf32, #tpu.memory_space<vmem>>, vector<1x256x128xf32>
    %8 = vector.shape_cast %7 : vector<1x256x128xf32> to vector<256x128xf32>
    %c0_10 = arith.constant 0 : index
    %c0_11 = arith.constant 0 : index
    %9 = vector.load %arg12[%c0_10, %c0_11] : memref<24x128xf32, #tpu.memory_space<vmem>>, vector<24x128xf32>
    %cst = arith.constant dense<0.000000e+00> : vector<256x128xf32>
    %10 = tpu.matmul %5, %9, %cst {dimension_numbers = #tpu.dot_dimension_numbers<[0], [0], [1], [1], [0, 1, 1, 1], [], []>} : vector<24x256xf32>, vector<24x128xf32>, vector<256x128xf32> -> vector<256x128xf32>
    %11 = arith.addf %10, %8 : vector<256x128xf32>
    %cst_12 = arith.constant 0.000000e+00 : f32
    %12 = vector.broadcast %cst_12 : f32 to vector<256x128xf32>
    %13 = arith.maximumf %11, %12 : vector<256x128xf32>
    %cst_13 = arith.constant 1.000000e-07 : f32
    %14 = vector.broadcast %cst_13 : f32 to vector<256x128xf32>
    %15 = arith.addf %13, %14 : vector<256x128xf32>
    %16 = vector.extract_strided_slice %1 {offsets = [6, 0], sizes = [1, 128], strides = [1, 1]} : vector<8x128xf32> to vector<1x128xf32>
    %17 = vector.broadcast %16 : vector<1x128xf32> to vector<256x128xf32>
    %18 = arith.mulf %15, %17 : vector<256x128xf32>
    %c0_14 = arith.constant 0 : index
    %c0_15 = arith.constant 0 : index
    %19 = vector.load %arg14[%c0_14, %c0_15] : memref<1x128xf32, #tpu.memory_space<vmem>>, vector<1x128xf32>
    %cst_16 = arith.constant dense<0xFF800000> : vector<128xf32>
    %20 = vector.multi_reduction <maximumf>, %18, %cst_16 [0] : vector<256x128xf32> to vector<128xf32>
    %21 = vector.shape_cast %20 : vector<128xf32> to vector<1x128xf32>
    %22 = arith.maximumf %19, %21 : vector<1x128xf32>
    %23 = arith.subf %19, %22 : vector<1x128xf32>
    %24 = math.exp %23 : vector<1x128xf32>
    %25 = vector.broadcast %22 : vector<1x128xf32> to vector<256x128xf32>
    %26 = arith.subf %18, %25 : vector<256x128xf32>
    %27 = math.exp %26 : vector<256x128xf32>
    %28 = arith.mulf %27, %15 : vector<256x128xf32>
    %cst_17 = arith.constant dense<0.000000e+00> : vector<24x128xf32>
    %29 = tpu.matmul %6, %27, %cst_17 {dimension_numbers = #tpu.dot_dimension_numbers<[1], [0], [0], [1], [0, 0, 1, 1], [], []>} : vector<24x256xf32>, vector<256x128xf32>, vector<24x128xf32> -> vector<24x128xf32>
    %cst_18 = arith.constant dense<0.000000e+00> : vector<24x128xf32>
    %30 = tpu.matmul %6, %28, %cst_18 {dimension_numbers = #tpu.dot_dimension_numbers<[1], [0], [0], [1], [0, 0, 1, 1], [], []>} : vector<24x256xf32>, vector<256x128xf32>, vector<24x128xf32> -> vector<24x128xf32>
    %c0_19 = arith.constant 0 : index
    %c0_20 = arith.constant 0 : index
    %31 = vector.load %arg14[%c0_19, %c0_20] : memref<1x128xf32, #tpu.memory_space<vmem>>, vector<1x128xf32>
    tpu.vector_store %arg14[%c0_19, %c0_20], %22 {strides = array<i32>} : memref<1x128xf32, #tpu.memory_space<vmem>>, vector<1x128xf32>,
    %c0_21 = arith.constant 0 : index
    %c0_22 = arith.constant 0 : index
    %32 = vector.load %arg15[%c0_21, %c0_22] : memref<24x128xf32, #tpu.memory_space<vmem>>, vector<24x128xf32>
    %33 = vector.broadcast %24 : vector<1x128xf32> to vector<24x128xf32>
    %34 = arith.mulf %33, %32 : vector<24x128xf32>
    %35 = arith.addf %34, %29 : vector<24x128xf32>
    %c0_23 = arith.constant 0 : index
    %c0_24 = arith.constant 0 : index
    %36 = vector.load %arg15[%c0_23, %c0_24] : memref<24x128xf32, #tpu.memory_space<vmem>>, vector<24x128xf32>
    tpu.vector_store %arg15[%c0_23, %c0_24], %35 {strides = array<i32>} : memref<24x128xf32, #tpu.memory_space<vmem>>, vector<24x128xf32>,
    %c0_25 = arith.constant 0 : index
    %c0_26 = arith.constant 0 : index
    %37 = vector.load %arg16[%c0_25, %c0_26] : memref<24x128xf32, #tpu.memory_space<vmem>>, vector<24x128xf32>
    %38 = vector.broadcast %24 : vector<1x128xf32> to vector<24x128xf32>
    %39 = arith.mulf %38, %37 : vector<24x128xf32>
    %40 = arith.addf %39, %30 : vector<24x128xf32>
    %c0_27 = arith.constant 0 : index
    %c0_28 = arith.constant 0 : index
    %41 = vector.load %arg16[%c0_27, %c0_28] : memref<24x128xf32, #tpu.memory_space<vmem>>, vector<24x128xf32>
    tpu.vector_store %arg16[%c0_27, %c0_28], %40 {strides = array<i32>} : memref<24x128xf32, #tpu.memory_space<vmem>>, vector<24x128xf32>,
    %c0_i32_29 = arith.constant 0 : i32
    %42 = arith.cmpi eq, %arg1, %c0_i32_29 : i32
    %43 = arith.extui %42 : i1 to i32
    %c0_i32_30 = arith.constant 0 : i32
    %44 = arith.cmpi ne, %43, %c0_i32_30 : i32
    scf.if %44 {
      %c0_31 = arith.constant 0 : index
      %c0_32 = arith.constant 0 : index
      %45 = vector.load %arg15[%c0_31, %c0_32] : memref<24x128xf32, #tpu.memory_space<vmem>>, vector<24x128xf32>
      %cst_33 = arith.constant 1.000000e-16 : f32
      %46 = vector.broadcast %cst_33 : f32 to vector<24x128xf32>
      %47 = arith.addf %45, %46 : vector<24x128xf32>
      %48 = tpu.reciprocal %47 {approx = true} : vector<24x128xf32> -> vector<24x128xf32>
      %c0_34 = arith.constant 0 : index
      %c0_35 = arith.constant 0 : index
      %49 = vector.load %arg16[%c0_34, %c0_35] : memref<24x128xf32, #tpu.memory_space<vmem>>, vector<24x128xf32>
      %50 = arith.mulf %49, %48 : vector<24x128xf32>
      %c0_36 = arith.constant 0 : index
      %c0_37 = arith.constant 0 : index
      %51 = vector.load %arg13[%c0_36, %c0_37] : memref<24x128xf32, #tpu.memory_space<vmem>>, vector<24x128xf32>
      %52 = arith.addf %50, %51 : vector<24x128xf32>
      %c0_38 = arith.constant 0 : index
      %c0_39 = arith.constant 0 : index
      %c0_40 = arith.constant 0 : index
      %53 = vector.load %arg9[%c0_38, %c0_39, %c0_40] : memref<1x128x128xf32, #tpu.memory_space<vmem>>, vector<1x128x128xf32>
      %54 = vector.shape_cast %53 : vector<1x128x128xf32> to vector<128x128xf32>
      %cst_41 = arith.constant dense<0.000000e+00> : vector<24x128xf32>
      %55 = tpu.matmul %52, %54, %cst_41 {dimension_numbers = #tpu.dot_dimension_numbers<[1], [0], [0], [1], [0, 0, 1, 1], [], []>} : vector<24x128xf32>, vector<128x128xf32>, vector<24x128xf32> -> vector<24x128xf32>
      %56 = vector.extract_strided_slice %1 {offsets = [4, 0], sizes = [1, 128], strides = [1, 1]} : vector<8x128xf32> to vector<1x128xf32>
      %57 = vector.broadcast %56 : vector<1x128xf32> to vector<24x128xf32>
      %58 = arith.addf %55, %57 : vector<24x128xf32>
      %cst_42 = arith.constant 0.000000e+00 : f32
      %59 = vector.broadcast %cst_42 : f32 to vector<24x128xf32>
      %60 = arith.maximumf %58, %59 : vector<24x128xf32>
      %c0_43 = arith.constant 0 : index
      %c0_44 = arith.constant 0 : index
      %c0_45 = arith.constant 0 : index
      %61 = vector.load %arg10[%c0_43, %c0_44, %c0_45] : memref<1x128x128xf32, #tpu.memory_space<vmem>>, vector<1x128x128xf32>
      %62 = vector.shape_cast %61 : vector<1x128x128xf32> to vector<128x128xf32>
      %cst_46 = arith.constant dense<0.000000e+00> : vector<24x128xf32>
      %63 = tpu.matmul %60, %62, %cst_46 {dimension_numbers = #tpu.dot_dimension_numbers<[1], [0], [0], [1], [0, 0, 1, 1], [], []>} : vector<24x128xf32>, vector<128x128xf32>, vector<24x128xf32> -> vector<24x128xf32>
      %64 = vector.extract_strided_slice %1 {offsets = [5, 0], sizes = [1, 128], strides = [1, 1]} : vector<8x128xf32> to vector<1x128xf32>
      %65 = vector.broadcast %64 : vector<1x128xf32> to vector<24x128xf32>
      %66 = arith.addf %63, %65 : vector<24x128xf32>
      %c0_47 = arith.constant 0 : index
      %c0_48 = arith.constant 0 : index
      %67 = vector.load %arg11[%c0_47, %c0_48] : memref<24x128xf32, #tpu.memory_space<vmem>>, vector<24x128xf32>
      %68 = arith.addf %67, %66 : vector<24x128xf32>
      %c0_49 = arith.constant 0 : index
      %c0_50 = arith.constant 0 : index
      %69 = vector.load %arg11[%c0_49, %c0_50] : memref<24x128xf32, #tpu.memory_space<vmem>>, vector<24x128xf32>
      tpu.vector_store %arg11[%c0_49, %c0_50], %68 {strides = array<i32>} : memref<24x128xf32, #tpu.memory_space<vmem>>, vector<24x128xf32>,
    } else {
    }
    return
  }
  func.func @transform_0(%arg0: i32, %arg1: i32) -> (i32, i32) {
    %c0_i32 = arith.constant 0 : i32
    %c0_i32_0 = arith.constant 0 : i32
    %c0_i32_1 = arith.constant 0 : i32
    return %c0_i32, %c0_i32_0 : i32, i32
  }
  func.func @transform_1(%arg0: i32, %arg1: i32) -> (i32, i32) {
    %c0_i32 = arith.constant 0 : i32
    %c0_i32_0 = arith.constant 0 : i32
    return %c0_i32, %arg1 : i32, i32
  }
  func.func @transform_2(%arg0: i32, %arg1: i32) -> (i32, i32) {
    %c0_i32 = arith.constant 0 : i32
    %c0_i32_0 = arith.constant 0 : i32
    return %c0_i32, %arg1 : i32, i32
  }
  func.func @transform_3(%arg0: i32, %arg1: i32) -> (i32, i32, i32) {
    %c0_i32 = arith.constant 0 : i32
    %c0_i32_0 = arith.constant 0 : i32
    return %arg0, %arg1, %c0_i32 : i32, i32, i32
  }
  func.func @transform_4(%arg0: i32, %arg1: i32) -> (i32, i32, i32) {
    %c0_i32 = arith.constant 0 : i32
    %c0_i32_0 = arith.constant 0 : i32
    %c0_i32_1 = arith.constant 0 : i32
    return %arg0, %c0_i32, %c0_i32_0 : i32, i32, i32
  }
  func.func @transform_5(%arg0: i32, %arg1: i32) -> (i32, i32) {
    %c0_i32 = arith.constant 0 : i32
    %c0_i32_0 = arith.constant 0 : i32
    %c0_i32_1 = arith.constant 0 : i32
    return %c0_i32, %c0_i32_0 : i32, i32
  }
  func.func @transform_6(%arg0: i32, %arg1: i32) -> (i32, i32) {
    %c0_i32 = arith.constant 0 : i32
    %c0_i32_0 = arith.constant 0 : i32
    %c0_i32_1 = arith.constant 0 : i32
    return %c0_i32, %c0_i32_0 : i32, i32
  }
  func.func @transform_7(%arg0: i32, %arg1: i32) -> (i32, i32, i32) {
    %c0_i32 = arith.constant 0 : i32
    %c0_i32_0 = arith.constant 0 : i32
    %c0_i32_1 = arith.constant 0 : i32
    return %arg0, %c0_i32, %c0_i32_0 : i32, i32, i32
  }
  func.func @transform_8(%arg0: i32, %arg1: i32) -> (i32, i32, i32) {
    %c0_i32 = arith.constant 0 : i32
    %c0_i32_0 = arith.constant 0 : i32
    %c0_i32_1 = arith.constant 0 : i32
    return %arg0, %c0_i32, %c0_i32_0 : i32, i32, i32
  }
  func.func @transform_9(%arg0: i32, %arg1: i32) -> (i32, i32) {
    %c0_i32 = arith.constant 0 : i32
    %c0_i32_0 = arith.constant 0 : i32
    %c0_i32_1 = arith.constant 0 : i32
    return %c0_i32, %c0_i32_0 : i32, i32
  }
}

</mosaic_0001>

<llo_original>
// kernel: tpu_custom_call.1
$region0: #{tpu_custom_call.1}
  #allocation0 [shape = 'u32[]', space=smem, size = 0x4, offset = 0x4, fixed_abs, tag = 'smem constant byte address 0x4 - core index']
  #allocation1 [shape = 'u32[144,128]{1,0:T(1,128)}', space=vmem, size = 0x12000, scoped, tag = 'internal scratch']
  #allocation2 [shape = 'f32[24,128]{1,0:T(8,128)}', space=vmem, size = 0x3000, scoped, tag = 'scratch operand']
  #allocation3 [shape = 'f32[24,128]{1,0:T(8,128)}', space=vmem, size = 0x3000, scoped, tag = 'scratch operand']
  #allocation4 [shape = 'f32[1,128]{1,0:T(1,128)}', space=vmem, size = 0x200, scoped, tag = 'scratch operand']
  #allocation5 [shape = 'f32[24,128]{1,0:T(8,128)}', space=vmem, size = 0x3000, scoped, tag = 'scratch operand']
  #allocation6 [shape = 'f32[24,128]{1,0:T(8,128)}', space=vmem, size = 0x3000, scoped, tag = 'scratch operand']
  %s0 = inlined_call_operand.hbm [shape: f32[24,128], index: 0, kind: input, shape index: {}]
  %s1 = inlined_call_operand.hbm [shape: f32[24,256], index: 1, kind: input, shape index: {}]
  %s2 = inlined_call_operand.hbm [shape: f32[24,256], index: 2, kind: input, shape index: {}]
  %s3 = inlined_call_operand.hbm [shape: f32[3,256,128], index: 3, kind: input, shape index: {}]
  %s4 = inlined_call_operand.hbm [shape: f32[3,8,128], index: 4, kind: input, shape index: {}]
  %s5 = inlined_call_operand.hbm [shape: f32[128,128], index: 5, kind: input, shape index: {}]
  %s6 = inlined_call_operand.hbm [shape: f32[128,128], index: 6, kind: input, shape index: {}]
  %s7 = inlined_call_operand.hbm [shape: f32[3,128,128], index: 7, kind: input, shape index: {}]
  %s8 = inlined_call_operand.hbm [shape: f32[3,128,128], index: 8, kind: input, shape index: {}]
  %s9 = inlined_call_operand.hbm [shape: f32[24,128], index: 9, kind: output, shape index: {}]
  %s10 = sld [smem:[#allocation0]]
  $region121: #{tpu_custom_call.1} parent=0
    _
  %s12 = ssub.s32 1, %s10
  %s13 = scalar_select 0, %s12, %s10
  $region1: #{tpu_custom_call.1} parent=0
    #allocation7 [shape = 'u8[12288]{0}', space=vmem, size = 0x3000, scoped, tag = 'input window, operand 0, single buffered']
    #allocation8 [shape = 's32[2]{0}', space=sflag, size = 0x8, scoped, tag = 'scoped memory for tpu_custom_call.1']
    #allocation9 [shape = 's32[2]{0}', space=sflag, size = 0x8, scoped, tag = 'scoped memory for tpu_custom_call.1']
    #allocation10 [shape = 'u8[24576]{0}', space=vmem, size = 0x6000, scoped, tag = 'input window, operand 1, single buffered']
    #allocation11 [shape = 's32[1]{0}', space=sflag, size = 0x4, scoped, tag = 'scoped memory for tpu_custom_call.1']
    #allocation12 [shape = 'u8[24576]{0}', space=vmem, size = 0x6000, scoped, tag = 'input window, operand 2, single buffered']
    #allocation13 [shape = 'u8[262144]{0}', space=vmem, size = 0x40000, scoped, tag = 'input window, operand 3']
    #allocation14 [shape = 's32[2]{0}', space=sflag, size = 0x8, scoped, tag = 'scoped memory for tpu_custom_call.1']
    #allocation15 [shape = 'u8[8192]{0}', space=vmem, size = 0x2000, scoped, tag = 'input window, operand 4']
    #allocation16 [shape = 'u8[65536]{0}', space=vmem, size = 0x10000, scoped, tag = 'input window, operand 5, single buffered']
    #allocation17 [shape = 's32[1]{0}', space=sflag, size = 0x4, scoped, tag = 'scoped memory for tpu_custom_call.1']
    #allocation18 [shape = 'u8[65536]{0}', space=vmem, size = 0x10000, scoped, tag = 'input window, operand 6, single buffered']
    #allocation19 [shape = 'u8[131072]{0}', space=vmem, size = 0x20000, scoped, tag = 'input window, operand 7']
    #allocation20 [shape = 's32[2]{0}', space=sflag, size = 0x8, scoped, tag = 'scoped memory for tpu_custom_call.1']
    #allocation21 [shape = 'u8[131072]{0}', space=vmem, size = 0x20000, scoped, tag = 'input window, operand 8']
    #allocation22 [shape = 'u8[12288]{0}', space=vmem, size = 0x3000, scoped, tag = 'output window, operand 0, single buffered']
    %14 = vsyncpa [#allocation8], 0
    %15 = vsyncpa [#allocation11], 0
    %16 = vsyncpa [#allocation14], 0
    %s17 = scalar_lea.sflag [#allocation14], 1
    %18 = vsyncpa %s17, 0
    %19 = vsyncpa [#allocation17], 0
    %20 = vsyncpa [#allocation20], 0
    %s21 = scalar_lea.sflag [#allocation20], 1
    %22 = vsyncpa %s21, 0
    %23 = vsyncpa [#allocation9], 0
    loop: start=0, step=1, limit=5
    $region2: #{tpu_custom_call.1} parent=1 // loop_pre_header
      _
    $region3: #{tpu_custom_call.1} parent=1 // loop_header
      %s25 = sphi 0, %s29
      %p26 = scmp.ge.s32.totalorder %s25, 5
      %s32 = sphi 0, %s44
      %s33 = sphi 0, %s40
      %s34 = sphi 0, %s32
      %s35 = sphi 0, %s33
      %s36 = sphi 0, %s34
      %s37 = sphi 0, %s35
      %s45 = sphi 0, %s45
      %s47 = sphi 0, %s45
      %s48 = sphi 0, %s47
      %s62 = sphi 0, %s48
      %s68 = sphi 0, %s70
      %s71 = sphi 0, %s68
      %s72 = sphi 0, %s71
      %s88 = sphi 0, %s72
      %s94 = sphi 0, %s96
      %s97 = sphi 0, %s94
      %s98 = sphi 0, %s97
      %s114 = sphi 0, %s98
      %s122 = sphi 0, %s124
      %s125 = sphi 0, %s122
      %s126 = sphi 0, %s125
      %s142 = sphi 0, %s126
      %s148 = sphi 0, %s150
      %s151 = sphi 0, %s148
      %s152 = sphi 0, %s151
      %s168 = sphi 0, %s152
      %s172 = sphi 0, %s172
      %s174 = sphi 0, %s172
      %s175 = sphi 0, %s174
      %s189 = sphi 0, %s175
      %s193 = sphi 0, %s193
      %s195 = sphi 0, %s193
      %s196 = sphi 0, %s195
      %s210 = sphi 0, %s196
      %s216 = sphi 0, %s218
      %s219 = sphi 0, %s216
      %s220 = sphi 0, %s219
      %s236 = sphi 0, %s220
      %s242 = sphi 0, %s244
      %s245 = sphi 0, %s242
      %s246 = sphi 0, %s245
      %s262 = sphi 0, %s246
      %s266 = sphi 0, %s266
      %s268 = sphi 0, %s266
      %s269 = sphi 0, %s268
      %s283 = sphi 0, %s269
    $region4: #{tpu_custom_call.1} parent=1 // loop_header_branch
      %28 = sbr.rel (%p26) target = $region8
    $region5: #{tpu_custom_call.1} parent=1 // loop_body
      %s30 = ssub.s32 %s25, 1
      %s31 = ssub.s32 %s25, 2
      %s38 = sadd.s32 1, %s33
      %p39 = scmp.ge.s32.totalorder %s38, 1
      %s40 = scalar_select %p39, 0, %s38
      %s41 = sadd.s32 1, %s32
      %s42 = scalar_select %p39, %s41, %s32
      %p43 = scmp.ge.s32.totalorder %s42, 3
      %s44 = scalar_select %p43, 0, %s42
      %s46 = sadd.s32 %s45, 1
      %p49 = scmp.eq.s32.totalorder %s25, 2
      %p50 = scmp.ne.s32.totalorder %s45, %s47
      %p51 = scmp.eq.s32.totalorder %s25, 0
      %p52 = por %p50, %p51
      %p53 = scmp.ne.s32.totalorder %s45, %s47
      %p54 = scmp.eq.s32.totalorder %s30, 2
      %p55 = por %p53, %p54
      %p56 = scmp.ne.s32.totalorder %s47, %s48
      %p57 = scmp.eq.s32.totalorder %s30, 0
      %p58 = por %p56, %p57
      %p59 = scmp.ne.s32.totalorder %s47, %s48
      %p60 = scmp.eq.s32.totalorder %s31, 2
      %p61 = por %p59, %p60
      %p63 = scmp.ne.s32.totalorder %s48, %s62
      %p64 = scmp.eq.s32.totalorder %s31, 0
      %p65 = por %p63, %p64
      %s66 = ssub.s32 %s33, %s40
      %p67 = scmp.eq.s32.totalorder %s66, 0
      %s69 = sadd.s32 %s68, 1
      %s70 = scalar_select %p67, %s68, %s69
      %p73 = pneg %p67
      %p74 = scmp.eq.s32.totalorder %s25, 2
      %p75 = por %p73, %p74
      %p76 = scmp.ne.s32.totalorder %s68, %s71
      %p77 = scmp.eq.s32.totalorder %s25, 0
      %p78 = por %p76, %p77
      %p79 = scmp.ne.s32.totalorder %s68, %s71
      %p80 = scmp.eq.s32.totalorder %s30, 2
      %p81 = por %p79, %p80
      %p82 = scmp.ne.s32.totalorder %s71, %s72
      %p83 = scmp.eq.s32.totalorder %s30, 0
      %p84 = por %p82, %p83
      %p85 = scmp.ne.s32.totalorder %s71, %s72
      %p86 = scmp.eq.s32.totalorder %s31, 2
      %p87 = por %p85, %p86
      %p89 = scmp.ne.s32.totalorder %s72, %s88
      %p90 = scmp.eq.s32.totalorder %s31, 0
      %p91 = por %p89, %p90
      %s92 = ssub.s32 %s33, %s40
      %p93 = scmp.eq.s32.totalorder %s92, 0
      %s95 = sadd.s32 %s94, 1
      %s96 = scalar_select %p93, %s94, %s95
      %p99 = pneg %p93
      %p100 = scmp.eq.s32.totalorder %s25, 2
      %p101 = por %p99, %p100
      %p102 = scmp.ne.s32.totalorder %s94, %s97
      %p103 = scmp.eq.s32.totalorder %s25, 0
      %p104 = por %p102, %p103
      %p105 = scmp.ne.s32.totalorder %s94, %s97
      %p106 = scmp.eq.s32.totalorder %s30, 2
      %p107 = por %p105, %p106
      %p108 = scmp.ne.s32.totalorder %s97, %s98
      %p109 = scmp.eq.s32.totalorder %s30, 0
      %p110 = por %p108, %p109
      %p111 = scmp.ne.s32.totalorder %s97, %s98
      %p112 = scmp.eq.s32.totalorder %s31, 2
      %p113 = por %p111, %p112
      %p115 = scmp.ne.s32.totalorder %s98, %s114
      %p116 = scmp.eq.s32.totalorder %s31, 0
      %p117 = por %p115, %p116
      %s118 = ssub.s32 %s32, %s44
      %s119 = ssub.s32 %s33, %s40
      %s120 = sor.u32 %s118, %s119
      %p121 = scmp.eq.s32.totalorder %s120, 0
      %s123 = sadd.s32 %s122, 1
      %s124 = scalar_select %p121, %s122, %s123
      %p127 = pneg %p121
      %p128 = scmp.eq.s32.totalorder %s25, 2
      %p129 = por %p127, %p128
      %p130 = scmp.ne.s32.totalorder %s122, %s125
      %p131 = scmp.eq.s32.totalorder %s25, 0
      %p132 = por %p130, %p131
      %p133 = scmp.ne.s32.totalorder %s122, %s125
      %p134 = scmp.eq.s32.totalorder %s30, 2
      %p135 = por %p133, %p134
      %p136 = scmp.ne.s32.totalorder %s125, %s126
      %p137 = scmp.eq.s32.totalorder %s30, 0
      %p138 = por %p136, %p137
      %p139 = scmp.ne.s32.totalorder %s125, %s126
      %p140 = scmp.eq.s32.totalorder %s31, 2
      %p141 = por %p139, %p140
      %p143 = scmp.ne.s32.totalorder %s126, %s142
      %p144 = scmp.eq.s32.totalorder %s31, 0
      %p145 = por %p143, %p144
      %s146 = ssub.s32 %s32, %s44
      %p147 = scmp.eq.s32.totalorder %s146, 0
      %s149 = sadd.s32 %s148, 1
      %s150 = scalar_select %p147, %s148, %s149
      %p153 = pneg %p147
      %p154 = scmp.eq.s32.totalorder %s25, 2
      %p155 = por %p153, %p154
      %p156 = scmp.ne.s32.totalorder %s148, %s151
      %p157 = scmp.eq.s32.totalorder %s25, 0
      %p158 = por %p156, %p157
      %p159 = scmp.ne.s32.totalorder %s148, %s151
      %p160 = scmp.eq.s32.totalorder %s30, 2
      %p161 = por %p159, %p160
      %p162 = scmp.ne.s32.totalorder %s151, %s152
      %p163 = scmp.eq.s32.totalorder %s30, 0
      %p164 = por %p162, %p163
      %p165 = scmp.ne.s32.totalorder %s151, %s152
      %p166 = scmp.eq.s32.totalorder %s31, 2
      %p167 = por %p165, %p166
      %p169 = scmp.ne.s32.totalorder %s152, %s168
      %p170 = scmp.eq.s32.totalorder %s31, 0
      %p171 = por %p169, %p170
      %s173 = sadd.s32 %s172, 1
      %p176 = scmp.eq.s32.totalorder %s25, 2
      %p177 = scmp.ne.s32.totalorder %s172, %s174
      %p178 = scmp.eq.s32.totalorder %s25, 0
      %p179 = por %p177, %p178
      %p180 = scmp.ne.s32.totalorder %s172, %s174
      %p181 = scmp.eq.s32.totalorder %s30, 2
      %p182 = por %p180, %p181
      %p183 = scmp.ne.s32.totalorder %s174, %s175
      %p184 = scmp.eq.s32.totalorder %s30, 0
      %p185 = por %p183, %p184
      %p186 = scmp.ne.s32.totalorder %s174, %s175
      %p187 = scmp.eq.s32.totalorder %s31, 2
      %p188 = por %p186, %p187
      %p190 = scmp.ne.s32.totalorder %s175, %s189
      %p191 = scmp.eq.s32.totalorder %s31, 0
      %p192 = por %p190, %p191
      %s194 = sadd.s32 %s193, 1
      %p197 = scmp.eq.s32.totalorder %s25, 2
      %p198 = scmp.ne.s32.totalorder %s193, %s195
      %p199 = scmp.eq.s32.totalorder %s25, 0
      %p200 = por %p198, %p199
      %p201 = scmp.ne.s32.totalorder %s193, %s195
      %p202 = scmp.eq.s32.totalorder %s30, 2
      %p203 = por %p201, %p202
      %p204 = scmp.ne.s32.totalorder %s195, %s196
      %p205 = scmp.eq.s32.totalorder %s30, 0
      %p206 = por %p204, %p205
      %p207 = scmp.ne.s32.totalorder %s195, %s196
      %p208 = scmp.eq.s32.totalorder %s31, 2
      %p209 = por %p207, %p208
      %p211 = scmp.ne.s32.totalorder %s196, %s210
      %p212 = scmp.eq.s32.totalorder %s31, 0
      %p213 = por %p211, %p212
      %s214 = ssub.s32 %s32, %s44
      %p215 = scmp.eq.s32.totalorder %s214, 0
      %s217 = sadd.s32 %s216, 1
      %s218 = scalar_select %p215, %s216, %s217
      %p221 = pneg %p215
      %p222 = scmp.eq.s32.totalorder %s25, 2
      %p223 = por %p221, %p222
      %p224 = scmp.ne.s32.totalorder %s216, %s219
      %p225 = scmp.eq.s32.totalorder %s25, 0
      %p226 = por %p224, %p225
      %p227 = scmp.ne.s32.totalorder %s216, %s219
      %p228 = scmp.eq.s32.totalorder %s30, 2
      %p229 = por %p227, %p228
      %p230 = scmp.ne.s32.totalorder %s219, %s220
      %p231 = scmp.eq.s32.totalorder %s30, 0
      %p232 = por %p230, %p231
      %p233 = scmp.ne.s32.totalorder %s219, %s220
      %p234 = scmp.eq.s32.totalorder %s31, 2
      %p235 = por %p233, %p234
      %p237 = scmp.ne.s32.totalorder %s220, %s236
      %p238 = scmp.eq.s32.totalorder %s31, 0
      %p239 = por %p237, %p238
      %s240 = ssub.s32 %s32, %s44
      %p241 = scmp.eq.s32.totalorder %s240, 0
      %s243 = sadd.s32 %s242, 1
      %s244 = scalar_select %p241, %s242, %s243
      %p247 = pneg %p241
      %p248 = scmp.eq.s32.totalorder %s25, 2
      %p249 = por %p247, %p248
      %p250 = scmp.ne.s32.totalorder %s242, %s245
      %p251 = scmp.eq.s32.totalorder %s25, 0
      %p252 = por %p250, %p251
      %p253 = scmp.ne.s32.totalorder %s242, %s245
      %p254 = scmp.eq.s32.totalorder %s30, 2
      %p255 = por %p253, %p254
      %p256 = scmp.ne.s32.totalorder %s245, %s246
      %p257 = scmp.eq.s32.totalorder %s30, 0
      %p258 = por %p256, %p257
      %p259 = scmp.ne.s32.totalorder %s245, %s246
      %p260 = scmp.eq.s32.totalorder %s31, 2
      %p261 = por %p259, %p260
      %p263 = scmp.ne.s32.totalorder %s246, %s262
      %p264 = scmp.eq.s32.totalorder %s31, 0
      %p265 = por %p263, %p264
      %s267 = sadd.s32 %s266, 1
      %p270 = scmp.eq.s32.totalorder %s25, 2
      %p271 = scmp.ne.s32.totalorder %s266, %s268
      %p272 = scmp.eq.s32.totalorder %s25, 0
      %p273 = por %p271, %p272
      %p274 = scmp.ne.s32.totalorder %s266, %s268
      %p275 = scmp.eq.s32.totalorder %s30, 2
      %p276 = por %p274, %p275
      %p277 = scmp.ne.s32.totalorder %s268, %s269
      %p278 = scmp.eq.s32.totalorder %s30, 0
      %p279 = por %p277, %p278
      %p280 = scmp.ne.s32.totalorder %s268, %s269
      %p281 = scmp.eq.s32.totalorder %s31, 2
      %p282 = por %p280, %p281
      %p284 = scmp.ne.s32.totalorder %s269, %s283
      %p285 = scmp.eq.s32.totalorder %s31, 0
      %p286 = por %p284, %p285
      %p287 = scmp.le.s32.totalorder 1, %s25
      %p288 = scmp.lt.s32.totalorder %s25, 4
      %p289 = pnand %p287, %p288
      %p290 = pneg %p289
      // Predicated region
      $region9: #{tpu_custom_call.1} parent=5 // pred_check
        _
      $region10: #{tpu_custom_call.1} parent=5 // pred_check_branch
        %292 = sbr.rel (%p289) target = $region12
      $region11: #{tpu_custom_call.1} parent=5 // pred_region
        %s293 = ssub.s32 %s25, 1
        // Predicated region
        $region13: #{tpu_custom_call.1} parent=11 // pred_check
          %p294 = pneg %p58
        $region14: #{tpu_custom_call.1} parent=11 // pred_check_branch
          %296 = sbr.rel (%p294) target = $region16
        $region15: #{tpu_custom_call.1} parent=11 // pred_region
          %s298 = ssub.s32 384, 384
          %299 = vsyncadd [#allocation8], %s298
          %s300 = sshll.u32 [#allocation7], 4
          %s301 = int_to_ptr.vmem [resolvable:$true] %s300
          %306 = dma.hbm_to_vmem [thread:$0]  %s0, 384, %s301, [#allocation8], 128, 128, 8
        $region16: #{tpu_custom_call.1} parent=11 // pred_fallthru
          _
        // Predicated region
        $region17: #{tpu_custom_call.1} parent=11 // pred_check
          %p307 = pneg %p84
        $region18: #{tpu_custom_call.1} parent=11 // pred_check_branch
          %309 = sbr.rel (%p307) target = $region20
        $region19: #{tpu_custom_call.1} parent=11 // pred_region
          %s310 = smul.u32 2, %s35
          %s312 = ssub.s32 768, 768
          %313 = vsyncadd [#allocation11], %s312
          %s314 = smul.addr %s310, 128
          %s315 = scalar_lea.hbm %s1, %s314
          %s316 = sshll.u32 [#allocation10], 4
          %s317 = int_to_ptr.vmem [resolvable:$true] %s316
          %322 = dma.hbm_to_vmem [thread:$0]  %s315, 768, %s317, [#allocation11], 256, 256, 16
        $region20: #{tpu_custom_call.1} parent=11 // pred_fallthru
          _
        // Predicated region
        $region21: #{tpu_custom_call.1} parent=11 // pred_check
          %p323 = pneg %p110
        $region22: #{tpu_custom_call.1} parent=11 // pred_check_branch
          %325 = sbr.rel (%p323) target = $region24
        $region23: #{tpu_custom_call.1} parent=11 // pred_region
          %s326 = smul.u32 2, %s35
          %s328 = ssub.s32 768, 768
          %329 = vsyncadd [#allocation11], %s328
          %s330 = smul.addr %s326, 128
          %s331 = scalar_lea.hbm %s2, %s330
          %s332 = sshll.u32 [#allocation12], 4
          %s333 = int_to_ptr.vmem [resolvable:$true] %s332
          %338 = dma.hbm_to_vmem [thread:$0]  %s331, 768, %s333, [#allocation11], 256, 256, 16
        $region24: #{tpu_custom_call.1} parent=11 // pred_fallthru
          _
        // Predicated region
        $region25: #{tpu_custom_call.1} parent=11 // pred_check
          %p339 = pneg %p185
        $region26: #{tpu_custom_call.1} parent=11 // pred_check_branch
          %341 = sbr.rel (%p339) target = $region28
        $region27: #{tpu_custom_call.1} parent=11 // pred_region
          %s343 = ssub.s32 2048, 2048
          %344 = vsyncadd [#allocation17], %s343
          %s345 = sshll.u32 [#allocation16], 4
          %s346 = int_to_ptr.vmem [resolvable:$true] %s345
          %351 = dma.hbm_to_vmem [thread:$0]  %s5, 2048, %s346, [#allocation17], 128, 128, 8
        $region28: #{tpu_custom_call.1} parent=11 // pred_fallthru
          _
        // Predicated region
        $region29: #{tpu_custom_call.1} parent=11 // pred_check
          %p352 = pneg %p206
        $region30: #{tpu_custom_call.1} parent=11 // pred_check_branch
          %354 = sbr.rel (%p352) target = $region32
        $region31: #{tpu_custom_call.1} parent=11 // pred_region
          %s356 = ssub.s32 2048, 2048
          %357 = vsyncadd [#allocation17], %s356
          %s358 = sshll.u32 [#allocation18], 4
          %s359 = int_to_ptr.vmem [resolvable:$true] %s358
          %364 = dma.hbm_to_vmem [thread:$0]  %s6, 2048, %s359, [#allocation17], 128, 128, 8
        $region32: #{tpu_custom_call.1} parent=11 // pred_fallthru
          _
      $region12: #{tpu_custom_call.1} parent=5 // pred_fallthru
        _
      %p365 = scmp.lt.s32.totalorder %s25, 3
      // Predicated region
      $region33: #{tpu_custom_call.1} parent=5 // pred_check
        %p366 = pneg %p365
      $region34: #{tpu_custom_call.1} parent=5 // pred_check_branch
        %368 = sbr.rel (%p366) target = $region36
      $region35: #{tpu_custom_call.1} parent=5 // pred_region
        // Predicated region
        $region37: #{tpu_custom_call.1} parent=35 // pred_check
          %p369 = pneg %p132
        $region38: #{tpu_custom_call.1} parent=35 // pred_check_branch
          %371 = sbr.rel (%p369) target = $region40
        $region39: #{tpu_custom_call.1} parent=35 // pred_region
          %s372 = sand.u32 %s25, 1
          %s373 = scalar_lea.sflag [#allocation14], %s372
          %s374 = sand.u32 %s122, 1
          %s375 = smul.addr %s374, 256
          %s376 = scalar_lea.vmem [#allocation13], %s375
          %s377 = smul.u32 32, %s33
          %s379 = ssub.s32 4096, 4096
          %380 = vsyncadd %s373, %s379
          %s381 = smul.addr %s32, 32
          %s382 = sadd.s32 %s377, %s381
          %s383 = smul.addr %s382, 128
          %s384 = scalar_lea.hbm %s3, %s383
          %s385 = sshll.u32 %s376, 4
          %s386 = int_to_ptr.vmem [resolvable:$true] %s385
          %391 = dma.hbm_to_vmem [thread:$0]  %s384, 4096, %s386, %s373, 128, 128, 8
        $region40: #{tpu_custom_call.1} parent=35 // pred_fallthru
          _
        // Predicated region
        $region41: #{tpu_custom_call.1} parent=35 // pred_check
          %p392 = pneg %p158
        $region42: #{tpu_custom_call.1} parent=35 // pred_check_branch
          %394 = sbr.rel (%p392) target = $region44
        $region43: #{tpu_custom_call.1} parent=35 // pred_region
          %s395 = sand.u32 %s25, 1
          %s396 = scalar_lea.sflag [#allocation14], %s395
          %s397 = sand.u32 %s148, 1
          %s398 = smul.addr %s397, 8
          %s399 = scalar_lea.vmem [#allocation15], %s398
          %s401 = ssub.s32 128, 128
          %402 = vsyncadd %s396, %s401
          %s403 = smul.addr %s32, 128
          %s404 = scalar_lea.hbm %s4, %s403
          %s406 = sshll.u32 %s399, 4
          %s407 = int_to_ptr.vmem [resolvable:$true] %s406
          %409 = dma.hbm_to_vmem [thread:$0]  %s404, 128, %s407, %s396
        $region44: #{tpu_custom_call.1} parent=35 // pred_fallthru
          _
        // Predicated region
        $region45: #{tpu_custom_call.1} parent=35 // pred_check
          %p410 = pneg %p226
        $region46: #{tpu_custom_call.1} parent=35 // pred_check_branch
          %412 = sbr.rel (%p410) target = $region48
        $region47: #{tpu_custom_call.1} parent=35 // pred_region
          %s413 = sand.u32 %s25, 1
          %s414 = scalar_lea.sflag [#allocation20], %s413
          %s415 = sand.u32 %s216, 1
          %s416 = smul.addr %s415, 128
          %s417 = scalar_lea.vmem [#allocation19], %s416
          %s419 = ssub.s32 2048, 2048
          %420 = vsyncadd %s414, %s419
          %s421 = smul.addr %s32, 16
          %s422 = smul.addr %s421, 128
          %s423 = scalar_lea.hbm %s7, %s422
          %s424 = sshll.u32 %s417, 4
          %s425 = int_to_ptr.vmem [resolvable:$true] %s424
          %430 = dma.hbm_to_vmem [thread:$0]  %s423, 2048, %s425, %s414, 128, 128, 8
        $region48: #{tpu_custom_call.1} parent=35 // pred_fallthru
          _
        // Predicated region
        $region49: #{tpu_custom_call.1} parent=35 // pred_check
          %p431 = pneg %p252
        $region50: #{tpu_custom_call.1} parent=35 // pred_check_branch
          %433 = sbr.rel (%p431) target = $region52
        $region51: #{tpu_custom_call.1} parent=35 // pred_region
          %s434 = sand.u32 %s25, 1
          %s435 = scalar_lea.sflag [#allocation20], %s434
          %s436 = sand.u32 %s242, 1
          %s437 = smul.addr %s436, 128
          %s438 = scalar_lea.vmem [#allocation21], %s437
          %s440 = ssub.s32 2048, 2048
          %441 = vsyncadd %s435, %s440
          %s442 = smul.addr %s32, 16
          %s443 = smul.addr %s442, 128
          %s444 = scalar_lea.hbm %s8, %s443
          %s445 = sshll.u32 %s438, 4
          %s446 = int_to_ptr.vmem [resolvable:$true] %s445
          %451 = dma.hbm_to_vmem [thread:$0]  %s444, 2048, %s446, %s435, 128, 128, 8
        $region52: #{tpu_custom_call.1} parent=35 // pred_fallthru
          _
      $region36: #{tpu_custom_call.1} parent=5 // pred_fallthru
        _
      %p452 = scmp.le.s32.totalorder 1, %s25
      %p453 = scmp.lt.s32.totalorder %s25, 4
      %p454 = pnand %p452, %p453
      %p455 = pneg %p454
      // Predicated region
      $region53: #{tpu_custom_call.1} parent=5 // pred_check
        _
      $region54: #{tpu_custom_call.1} parent=5 // pred_check_branch
        %457 = sbr.rel (%p454) target = $region56
      $region55: #{tpu_custom_call.1} parent=5 // pred_region
        %s458 = ssub.s32 %s25, 1
        // Predicated region
        $region57: #{tpu_custom_call.1} parent=55 // pred_check
          %p459 = pneg %p58
        $region58: #{tpu_custom_call.1} parent=55 // pred_check_branch
          %461 = sbr.rel (%p459) target = $region60
        $region59: #{tpu_custom_call.1} parent=55 // pred_region
          %462 = dma.done [#allocation8], 384
        $region60: #{tpu_custom_call.1} parent=55 // pred_fallthru
          _
        // Predicated region
        $region61: #{tpu_custom_call.1} parent=55 // pred_check
          %p463 = pneg %p84
        $region62: #{tpu_custom_call.1} parent=55 // pred_check_branch
          %465 = sbr.rel (%p463) target = $region64
        $region63: #{tpu_custom_call.1} parent=55 // pred_region
          %466 = dma.done [#allocation11], 768
        $region64: #{tpu_custom_call.1} parent=55 // pred_fallthru
          _
        // Predicated region
        $region65: #{tpu_custom_call.1} parent=55 // pred_check
          %p467 = pneg %p110
        $region66: #{tpu_custom_call.1} parent=55 // pred_check_branch
          %469 = sbr.rel (%p467) target = $region68
        $region67: #{tpu_custom_call.1} parent=55 // pred_region
          %470 = dma.done [#allocation11], 768
        $region68: #{tpu_custom_call.1} parent=55 // pred_fallthru
          _
        %s471 = sand.u32 %s30, 1
        %s472 = scalar_lea.sflag [#allocation14], %s471
        %s473 = sand.u32 %s125, 1
        %s474 = smul.addr %s473, 256
        %s475 = scalar_lea.vmem [#allocation13], %s474
        // Predicated region
        $region69: #{tpu_custom_call.1} parent=55 // pred_check
          %p476 = pneg %p138
        $region70: #{tpu_custom_call.1} parent=55 // pred_check_branch
          %478 = sbr.rel (%p476) target = $region72
        $region71: #{tpu_custom_call.1} parent=55 // pred_region
          %479 = dma.done %s472, 4096
        $region72: #{tpu_custom_call.1} parent=55 // pred_fallthru
          _
        %s480 = sand.u32 %s30, 1
        %s481 = scalar_lea.sflag [#allocation14], %s480
        %s482 = sand.u32 %s151, 1
        %s483 = smul.addr %s482, 8
        %s484 = scalar_lea.vmem [#allocation15], %s483
        // Predicated region
        $region73: #{tpu_custom_call.1} parent=55 // pred_check
          %p485 = pneg %p164
        $region74: #{tpu_custom_call.1} parent=55 // pred_check_branch
          %487 = sbr.rel (%p485) target = $region76
        $region75: #{tpu_custom_call.1} parent=55 // pred_region
          %488 = dma.done %s481, 128
        $region76: #{tpu_custom_call.1} parent=55 // pred_fallthru
          _
        // Predicated region
        $region77: #{tpu_custom_call.1} parent=55 // pred_check
          %p489 = pneg %p185
        $region78: #{tpu_custom_call.1} parent=55 // pred_check_branch
          %491 = sbr.rel (%p489) target = $region80
        $region79: #{tpu_custom_call.1} parent=55 // pred_region
          %492 = dma.done [#allocation17], 2048
        $region80: #{tpu_custom_call.1} parent=55 // pred_fallthru
          _
        // Predicated region
        $region81: #{tpu_custom_call.1} parent=55 // pred_check
          %p493 = pneg %p206
        $region82: #{tpu_custom_call.1} parent=55 // pred_check_branch
          %495 = sbr.rel (%p493) target = $region84
        $region83: #{tpu_custom_call.1} parent=55 // pred_region
          %496 = dma.done [#allocation17], 2048
        $region84: #{tpu_custom_call.1} parent=55 // pred_fallthru
          _
        %s497 = sand.u32 %s30, 1
        %s498 = scalar_lea.sflag [#allocation20], %s497
        %s499 = sand.u32 %s219, 1
        %s500 = smul.addr %s499, 128
        %s501 = scalar_lea.vmem [#allocation19], %s500
        // Predicated region
        $region85: #{tpu_custom_call.1} parent=55 // pred_check
          %p502 = pneg %p232
        $region86: #{tpu_custom_call.1} parent=55 // pred_check_branch
          %504 = sbr.rel (%p502) target = $region88
        $region87: #{tpu_custom_call.1} parent=55 // pred_region
          %505 = dma.done %s498, 2048
        $region88: #{tpu_custom_call.1} parent=55 // pred_fallthru
          _
        %s506 = sand.u32 %s30, 1
        %s507 = scalar_lea.sflag [#allocation20], %s506
        %s508 = sand.u32 %s245, 1
        %s509 = smul.addr %s508, 128
        %s510 = scalar_lea.vmem [#allocation21], %s509
        // Predicated region
        $region89: #{tpu_custom_call.1} parent=55 // pred_check
          %p511 = pneg %p258
        $region90: #{tpu_custom_call.1} parent=55 // pred_check_branch
          %513 = sbr.rel (%p511) target = $region92
        $region91: #{tpu_custom_call.1} parent=55 // pred_region
          %514 = dma.done %s507, 2048
        $region92: #{tpu_custom_call.1} parent=55 // pred_fallthru
          _
        %p515 = pneg %p58
        %p516 = pneg %p55
        %p517 = pneg %p84
        %p518 = pneg %p81
        %p519 = pneg %p110
        %p520 = pneg %p107
        %s521 = sand.u32 %s30, 1
        %s522 = scalar_lea.sflag [#allocation14], %s521
        %s523 = sand.u32 %s125, 1
        %s524 = smul.addr %s523, 256
        %s525 = scalar_lea.vmem [#allocation13], %s524
        %p526 = pneg %p138
        %p527 = pneg %p135
        %s528 = sand.u32 %s30, 1
        %s529 = scalar_lea.sflag [#allocation14], %s528
        %s530 = sand.u32 %s151, 1
        %s531 = smul.addr %s530, 8
        %s532 = scalar_lea.vmem [#allocation15], %s531
        %p533 = pneg %p164
        %p534 = pneg %p161
        %p535 = pneg %p185
        %p536 = pneg %p182
        %p537 = pneg %p206
        %p538 = pneg %p203
        %s539 = sand.u32 %s30, 1
        %s540 = scalar_lea.sflag [#allocation20], %s539
        %s541 = sand.u32 %s219, 1
        %s542 = smul.addr %s541, 128
        %s543 = scalar_lea.vmem [#allocation19], %s542
        %p544 = pneg %p232
        %p545 = pneg %p229
        %s546 = sand.u32 %s30, 1
        %s547 = scalar_lea.sflag [#allocation20], %s546
        %s548 = sand.u32 %s245, 1
        %s549 = smul.addr %s548, 128
        %s550 = scalar_lea.vmem [#allocation21], %s549
        %p551 = pneg %p258
        %p552 = pneg %p255
        %p553 = pneg %p279
        %p554 = pneg %p276
        %s555 = smul.u32 2, %s35
        %s556 = smul.u32 2, %s35
        %s557 = smul.u32 32, %s35
        %v558 = vld [vmem:[%s484] sm:$0xff]
        %p559 = scmp.eq.s32.totalorder %s35, 0
        // Predicated region
        $region93: #{tpu_custom_call.1} parent=55 // pred_check
          %p560 = pneg %p559
        $region94: #{tpu_custom_call.1} parent=55 // pred_check_branch
          %562 = sbr.rel (%p560) target = $region96
        $region95: #{tpu_custom_call.1} parent=55 // pred_region
          %p563 = scmp.eq.s32.totalorder %s34, 0
          // Predicated region
          $region97: #{tpu_custom_call.1} parent=95 // pred_check
            %p564 = pneg %p563
          $region98: #{tpu_custom_call.1} parent=95 // pred_check_branch
            %566 = sbr.rel (%p564) target = $region100
          $region99: #{tpu_custom_call.1} parent=95 // pred_region
            %v567 = vld [vmem:[#allocation7] sm:$0xff]
            %v568 = vld [vmem:[#allocation7 + $0x8] sm:$0xff]
            %v569 = vld [vmem:[#allocation7 + $0x10] sm:$0xff]
            %v570 = vld [vmem:[#allocation16] sm:$0xff]
            %v571 = vld [vmem:[#allocation16 + $0x8] sm:$0xff]
            %v572 = vld [vmem:[#allocation16 + $0x10] sm:$0xff]
            %v573 = vld [vmem:[#allocation16 + $0x18] sm:$0xff]
            %v574 = vld [vmem:[#allocation16 + $0x20] sm:$0xff]
            %v575 = vld [vmem:[#allocation16 + $0x28] sm:$0xff]
            %v576 = vld [vmem:[#allocation16 + $0x30] sm:$0xff]
            %v577 = vld [vmem:[#allocation16 + $0x38] sm:$0xff]
            %v578 = vld [vmem:[#allocation16 + $0x40] sm:$0xff]
            %v579 = vld [vmem:[#allocation16 + $0x48] sm:$0xff]
            %v580 = vld [vmem:[#allocation16 + $0x50] sm:$0xff]
            %v581 = vld [vmem:[#allocation16 + $0x58] sm:$0xff]
            %v582 = vld [vmem:[#allocation16 + $0x60] sm:$0xff]
            %v583 = vld [vmem:[#allocation16 + $0x68] sm:$0xff]
            %v584 = vld [vmem:[#allocation16 + $0x70] sm:$0xff]
            %v585 = vld [vmem:[#allocation16 + $0x78] sm:$0xff]
            %v586 = vlaneseq
            %v587 = vshrl.u32 %v586, 7
            %v588 = vsub.s32 2, %v587
            %v589 = vrot.slane %v558, %v588
            %590 = vmatprep.subr.mxu0 0.0
            %591 = vmatpush1.msra.mxu0 %v570
            %592 = vmatprep.subr.mxu0 0.0
            %593 = vmatpush1.msra.mxu0 %v571
            %594 = vmatprep.subr.mxu0 0.0
            %595 = vmatpush1.msra.mxu0 %v572
            %596 = vmatprep.subr.mxu0 0.0
            %597 = vmatpush1.msra.mxu0 %v573
            %598 = vmatprep.subr.mxu0 0.0
            %599 = vmatpush1.msra.mxu0 %v574
            %600 = vmatprep.subr.mxu0 0.0
            %601 = vmatpush1.msra.mxu0 %v575
            %602 = vmatprep.subr.mxu0 0.0
            %603 = vmatpush1.msra.mxu0 %v576
            %604 = vmatprep.subr.mxu0 0.0
            %605 = vmatpush1.msra.mxu0 %v577
            %606 = vmatprep.subr.mxu0 0.0
            %607 = vmatpush1.msra.mxu0 %v578
            %608 = vmatprep.subr.mxu0 0.0
            %609 = vmatpush1.msra.mxu0 %v579
            %610 = vmatprep.subr.mxu0 0.0
            %611 = vmatpush1.msra.mxu0 %v580
            %612 = vmatprep.subr.mxu0 0.0
            %613 = vmatpush1.msra.mxu0 %v581
            %614 = vmatprep.subr.mxu0 0.0
            %615 = vmatpush1.msra.mxu0 %v582
            %616 = vmatprep.subr.mxu0 0.0
            %617 = vmatpush1.msra.mxu0 %v583
            %618 = vmatprep.subr.mxu0 0.0
            %619 = vmatpush1.msra.mxu0 %v584
            %620 = vmatprep.subr.mxu0 0.0
            %621 = vmatpush1.msra.mxu0 %v585
            %622 = vmatprep.subr.mxu0 0.0
            %623 = vmatpush1.msra.mxu0 0.0
            %624 = vmatprep.subr.mxu0 0.0
            %625 = vmatpush1.msra.mxu0 0.0
            %626 = vmatprep.subr.mxu0 0.0
            %627 = vmatpush1.msra.mxu0 0.0
            %628 = vmatprep.subr.mxu0 0.0
            %629 = vmatpush1.msra.mxu0 0.0
            %630 = vmatprep.subr.mxu0 0.0
            %631 = vmatpush1.msra.mxu0 0.0
            %632 = vmatprep.subr.mxu0 0.0
            %633 = vmatpush1.msra.mxu0 0.0
            %634 = vmatprep.subr.mxu0 0.0
            %635 = vmatpush1.msra.mxu0 0.0
            %636 = vmatprep.subr.mxu0 0.0
            %637 = vmatpush1.msra.mxu0 0.0
            %638 = vmatprep.subr.mxu0 0.0
            %639 = vmatpush1.msra.mxu0 0.0
            %640 = vmatprep.subr.mxu0 0.0
            %641 = vmatpush1.msra.mxu0 0.0
            %642 = vmatprep.subr.mxu0 0.0
            %643 = vmatpush1.msra.mxu0 0.0
            %644 = vmatprep.subr.mxu0 0.0
            %645 = vmatpush1.msra.mxu0 0.0
            %646 = vmatprep.subr.mxu0 0.0
            %647 = vmatpush1.msra.mxu0 0.0
            %648 = vmatprep.subr.mxu0 0.0
            %649 = vmatpush1.msra.mxu0 0.0
            %650 = vmatprep.subr.mxu0 0.0
            %651 = vmatpush1.msra.mxu0 0.0
            %652 = vmatprep.subr.mxu0 0.0
            %653 = vmatpush1.msra.mxu0 0.0
            %654 = vmatprep.mubr.f32.mxu0 0.0
            %655 = vmatmul.mubr.f32.gmra.mrb[0].mxu0 %v567
            %v656 = vpop.f32.mrb[0].mxu0
            %v657 = vadd.f32 %v589, %v656
            %v658 = vpop.f32.mrb[0].mxu0
            %659 = vmatprep.mubr.f32.mxu0 0.0
            %660 = vmatmul.mubr.f32.gmra.mrb[0].mxu0 %v568
            %v661 = vpop.f32.mrb[0].mxu0
            %v662 = vadd.f32 %v589, %v661
            %v663 = vpop.f32.mrb[0].mxu0
            %664 = vmatprep.mubr.f32.mxu0 0.0
            %665 = vmatmul.mubr.f32.gmra.mrb[0].mxu0 %v569
            %v666 = vpop.f32.mrb[0].mxu0
            %v667 = vadd.f32 %v589, %v666
            %v668 = vpop.f32.mrb[0].mxu0
            %669 = vdwg.mxu0
            %670 = vst [vmem:[#allocation2] sm:$0xff] %v657
            %671 = vst [vmem:[#allocation2 + $0x8] sm:$0xff] %v662
            %672 = vst [vmem:[#allocation2 + $0x10] sm:$0xff] %v667
            %v673 = vld [vmem:[#allocation18] sm:$0xff]
            %v674 = vld [vmem:[#allocation18 + $0x8] sm:$0xff]
            %v675 = vld [vmem:[#allocation18 + $0x10] sm:$0xff]
            %v676 = vld [vmem:[#allocation18 + $0x18] sm:$0xff]
            %v677 = vld [vmem:[#allocation18 + $0x20] sm:$0xff]
            %v678 = vld [vmem:[#allocation18 + $0x28] sm:$0xff]
            %v679 = vld [vmem:[#allocation18 + $0x30] sm:$0xff]
            %v680 = vld [vmem:[#allocation18 + $0x38] sm:$0xff]
            %v681 = vld [vmem:[#allocation18 + $0x40] sm:$0xff]
            %v682 = vld [vmem:[#allocation18 + $0x48] sm:$0xff]
            %v683 = vld [vmem:[#allocation18 + $0x50] sm:$0xff]
            %v684 = vld [vmem:[#allocation18 + $0x58] sm:$0xff]
            %v685 = vld [vmem:[#allocation18 + $0x60] sm:$0xff]
            %v686 = vld [vmem:[#allocation18 + $0x68] sm:$0xff]
            %v687 = vld [vmem:[#allocation18 + $0x70] sm:$0xff]
            %v688 = vld [vmem:[#allocation18 + $0x78] sm:$0xff]
            %v689 = vlaneseq
            %v690 = vshrl.u32 %v689, 7
            %v691 = vsub.s32 3, %v690
            %v692 = vrot.slane %v558, %v691
            %693 = vmatprep.subr.mxu0 0.0
            %694 = vmatpush1.msra.mxu0 %v673
            %695 = vmatprep.subr.mxu0 0.0
            %696 = vmatpush1.msra.mxu0 %v674
            %697 = vmatprep.subr.mxu0 0.0
            %698 = vmatpush1.msra.mxu0 %v675
            %699 = vmatprep.subr.mxu0 0.0
            %700 = vmatpush1.msra.mxu0 %v676
            %701 = vmatprep.subr.mxu0 0.0
            %702 = vmatpush1.msra.mxu0 %v677
            %703 = vmatprep.subr.mxu0 0.0
            %704 = vmatpush1.msra.mxu0 %v678
            %705 = vmatprep.subr.mxu0 0.0
            %706 = vmatpush1.msra.mxu0 %v679
            %707 = vmatprep.subr.mxu0 0.0
            %708 = vmatpush1.msra.mxu0 %v680
            %709 = vmatprep.subr.mxu0 0.0
            %710 = vmatpush1.msra.mxu0 %v681
            %711 = vmatprep.subr.mxu0 0.0
            %712 = vmatpush1.msra.mxu0 %v682
            %713 = vmatprep.subr.mxu0 0.0
            %714 = vmatpush1.msra.mxu0 %v683
            %715 = vmatprep.subr.mxu0 0.0
            %716 = vmatpush1.msra.mxu0 %v684
            %717 = vmatprep.subr.mxu0 0.0
            %718 = vmatpush1.msra.mxu0 %v685
            %719 = vmatprep.subr.mxu0 0.0
            %720 = vmatpush1.msra.mxu0 %v686
            %721 = vmatprep.subr.mxu0 0.0
            %722 = vmatpush1.msra.mxu0 %v687
            %723 = vmatprep.subr.mxu0 0.0
            %724 = vmatpush1.msra.mxu0 %v688
            %725 = vmatprep.subr.mxu0 0.0
            %726 = vmatpush1.msra.mxu0 0.0
            %727 = vmatprep.subr.mxu0 0.0
            %728 = vmatpush1.msra.mxu0 0.0
            %729 = vmatprep.subr.mxu0 0.0
            %730 = vmatpush1.msra.mxu0 0.0
            %731 = vmatprep.subr.mxu0 0.0
            %732 = vmatpush1.msra.mxu0 0.0
            %733 = vmatprep.subr.mxu0 0.0
            %734 = vmatpush1.msra.mxu0 0.0
            %735 = vmatprep.subr.mxu0 0.0
            %736 = vmatpush1.msra.mxu0 0.0
            %737 = vmatprep.subr.mxu0 0.0
            %738 = vmatpush1.msra.mxu0 0.0
            %739 = vmatprep.subr.mxu0 0.0
            %740 = vmatpush1.msra.mxu0 0.0
            %741 = vmatprep.subr.mxu0 0.0
            %742 = vmatpush1.msra.mxu0 0.0
            %743 = vmatprep.subr.mxu0 0.0
            %744 = vmatpush1.msra.mxu0 0.0
            %745 = vmatprep.subr.mxu0 0.0
            %746 = vmatpush1.msra.mxu0 0.0
            %747 = vmatprep.subr.mxu0 0.0
            %748 = vmatpush1.msra.mxu0 0.0
            %749 = vmatprep.subr.mxu0 0.0
            %750 = vmatpush1.msra.mxu0 0.0
            %751 = vmatprep.subr.mxu0 0.0
            %752 = vmatpush1.msra.mxu0 0.0
            %753 = vmatprep.subr.mxu0 0.0
            %754 = vmatpush1.msra.mxu0 0.0
            %755 = vmatprep.subr.mxu0 0.0
            %756 = vmatpush1.msra.mxu0 0.0
            %757 = vmatprep.mubr.f32.mxu0 0.0
            %758 = vmatmul.mubr.f32.gmra.mrb[0].mxu0 %v567
            %v759 = vpop.f32.mrb[0].mxu0
            %v760 = vadd.f32 %v692, %v759
            %v761 = vpop.f32.mrb[0].mxu0
            %762 = vmatprep.mubr.f32.mxu0 0.0
            %763 = vmatmul.mubr.f32.gmra.mrb[0].mxu0 %v568
            %v764 = vpop.f32.mrb[0].mxu0
            %v765 = vadd.f32 %v692, %v764
            %v766 = vpop.f32.mrb[0].mxu0
            %767 = vmatprep.mubr.f32.mxu0 0.0
            %768 = vmatmul.mubr.f32.gmra.mrb[0].mxu0 %v569
            %v769 = vpop.f32.mrb[0].mxu0
            %v770 = vadd.f32 %v692, %v769
            %v771 = vpop.f32.mrb[0].mxu0
            %772 = vdwg.mxu0
            %773 = vst [vmem:[#allocation3] sm:$0xff] %v760
            %774 = vst [vmem:[#allocation3 + $0x8] sm:$0xff] %v765
            %775 = vst [vmem:[#allocation3 + $0x10] sm:$0xff] %v770
            %776 = vst [vmem:[#allocation22] sm:$0xff] 0.0
            %777 = vst [vmem:[#allocation22 + $0x8] sm:$0xff] 0.0
            %778 = vst [vmem:[#allocation22 + $0x10] sm:$0xff] 0.0
          $region100: #{tpu_custom_call.1} parent=95 // pred_fallthru
            _
          %p779 = scmp.gt.s32.totalorder %s34, 0
          // Predicated region
          $region101: #{tpu_custom_call.1} parent=95 // pred_check
            %p780 = pneg %p779
          $region102: #{tpu_custom_call.1} parent=95 // pred_check_branch
            %782 = sbr.rel (%p780) target = $region104
          $region103: #{tpu_custom_call.1} parent=95 // pred_region
            %v783 = vld [vmem:[#allocation22] sm:$0xff]
            %v784 = vld [vmem:[#allocation22 + $0x8] sm:$0xff]
            %v785 = vld [vmem:[#allocation22 + $0x10] sm:$0xff]
            %v786 = vlaneseq
            %v787 = vshrl.u32 %v786, 7
            %v788 = vsub.s32 0, %v787
            %v789 = vrot.slane %v558, %v788
            %v790 = vmul.f32 %v783, %v789
            %v791 = vmul.f32 %v784, %v789
            %v792 = vmul.f32 %v785, %v789
            %v793 = vlaneseq
            %v794 = vshrl.u32 %v793, 7
            %v795 = vsub.s32 1, %v794
            %v796 = vrot.slane %v558, %v795
            %v797 = vadd.f32 %v790, %v796
            %v798 = vadd.f32 %v791, %v796
            %v799 = vadd.f32 %v792, %v796
            %v800 = vmax.f32 %v797, 0.0
            %v801 = vmax.f32 %v798, 0.0
            %v802 = vmax.f32 %v799, 0.0
            %803 = vst [vmem:[#allocation2] sm:$0xff] %v800
            %804 = vst [vmem:[#allocation2 + $0x8] sm:$0xff] %v801
            %805 = vst [vmem:[#allocation2 + $0x10] sm:$0xff] %v802
            %806 = vst [vmem:[#allocation3] sm:$0xff] %v800
            %807 = vst [vmem:[#allocation3 + $0x8] sm:$0xff] %v801
            %808 = vst [vmem:[#allocation3 + $0x10] sm:$0xff] %v802
          $region104: #{tpu_custom_call.1} parent=95 // pred_fallthru
            _
          %809 = vst [vmem:[#allocation4] sm:$0x1] -1.329228e+36
          %810 = vst [vmem:[#allocation5] sm:$0xff] 0.0
          %811 = vst [vmem:[#allocation5 + $0x8] sm:$0xff] 0.0
          %812 = vst [vmem:[#allocation5 + $0x10] sm:$0xff] 0.0
          %813 = vst [vmem:[#allocation6] sm:$0xff] 0.0
          %814 = vst [vmem:[#allocation6 + $0x8] sm:$0xff] 0.0
          %815 = vst [vmem:[#allocation6 + $0x10] sm:$0xff] 0.0
        $region96: #{tpu_custom_call.1} parent=55 // pred_fallthru
          _
        %v816 = vld [vmem:[#allocation10] sm:$0xff]
        %v817 = vld [vmem:[#allocation10 + $0x8] sm:$0xff]
        %v818 = vld [vmem:[#allocation10 + $0x10] sm:$0xff]
        %v819 = vld [vmem:[#allocation10 + $0x18] sm:$0xff]
        %v820 = vld [vmem:[#allocation10 + $0x20] sm:$0xff]
        %v821 = vld [vmem:[#allocation10 + $0x28] sm:$0xff]
        %v822 = vld [vmem:[#allocation12] sm:$0xff]
        %v823 = vld [vmem:[#allocation12 + $0x8] sm:$0xff]
        %v824 = vld [vmem:[#allocation12 + $0x10] sm:$0xff]
        %v825 = vld [vmem:[#allocation12 + $0x18] sm:$0xff]
        %v826 = vld [vmem:[#allocation12 + $0x20] sm:$0xff]
        %v827 = vld [vmem:[#allocation12 + $0x28] sm:$0xff]
        %v828 = vld [vmem:[%s475] sm:$0xff]
        %v829 = vld [vmem:[%s475 + $0x8] sm:$0xff]
        %v830 = vld [vmem:[%s475 + $0x10] sm:$0xff]
        %v831 = vld [vmem:[%s475 + $0x18] sm:$0xff]
        %v832 = vld [vmem:[%s475 + $0x20] sm:$0xff]
        %v833 = vld [vmem:[%s475 + $0x28] sm:$0xff]
        %v834 = vld [vmem:[%s475 + $0x30] sm:$0xff]
        %v835 = vld [vmem:[%s475 + $0x38] sm:$0xff]
        %v836 = vld [vmem:[%s475 + $0x40] sm:$0xff]
        %v837 = vld [vmem:[%s475 + $0x48] sm:$0xff]
        %v838 = vld [vmem:[%s475 + $0x50] sm:$0xff]
        %v839 = vld [vmem:[%s475 + $0x58] sm:$0xff]
        %v840 = vld [vmem:[%s475 + $0x60] sm:$0xff]
        %v841 = vld [vmem:[%s475 + $0x68] sm:$0xff]
        %v842 = vld [vmem:[%s475 + $0x70] sm:$0xff]
        %v843 = vld [vmem:[%s475 + $0x78] sm:$0xff]
        %v844 = vld [vmem:[%s475 + $0x80] sm:$0xff]
        %v845 = vld [vmem:[%s475 + $0x88] sm:$0xff]
        %v846 = vld [vmem:[%s475 + $0x90] sm:$0xff]
        %v847 = vld [vmem:[%s475 + $0x98] sm:$0xff]
        %v848 = vld [vmem:[%s475 + $0xa0] sm:$0xff]
        %v849 = vld [vmem:[%s475 + $0xa8] sm:$0xff]
        %v850 = vld [vmem:[%s475 + $0xb0] sm:$0xff]
        %v851 = vld [vmem:[%s475 + $0xb8] sm:$0xff]
        %v852 = vld [vmem:[%s475 + $0xc0] sm:$0xff]
        %v853 = vld [vmem:[%s475 + $0xc8] sm:$0xff]
        %v854 = vld [vmem:[%s475 + $0xd0] sm:$0xff]
        %v855 = vld [vmem:[%s475 + $0xd8] sm:$0xff]
        %v856 = vld [vmem:[%s475 + $0xe0] sm:$0xff]
        %v857 = vld [vmem:[%s475 + $0xe8] sm:$0xff]
        %v858 = vld [vmem:[%s475 + $0xf0] sm:$0xff]
        %v859 = vld [vmem:[%s475 + $0xf8] sm:$0xff]
        %v860 = vld [vmem:[#allocation2] sm:$0xff]
        %v861 = vld [vmem:[#allocation2 + $0x8] sm:$0xff]
        %v862 = vld [vmem:[#allocation2 + $0x10] sm:$0xff]
        %863 = vxpose.xlu0.b32.start [1/16] %v816, 128
        %864 = vxpose.xlu0.b32.cont [2/16] %v818, 128
        %865 = vxpose.xlu0.b32.cont [3/16] %v820, 128
        %866 = vxpose.xlu0.b32.cont [4/16] 0.0, 128
        %867 = vxpose.xlu0.b32.cont [5/16] 0.0, 128
        %868 = vxpose.xlu0.b32.cont [6/16] 0.0, 128
        %869 = vxpose.xlu0.b32.cont [7/16] 0.0, 128
        %870 = vxpose.xlu0.b32.cont [8/16] 0.0, 128
        %871 = vxpose.xlu0.b32.cont [9/16] 0.0, 128
        %872 = vxpose.xlu0.b32.cont [10/16] 0.0, 128
        %873 = vxpose.xlu0.b32.cont [11/16] 0.0, 128
        %874 = vxpose.xlu0.b32.cont [12/16] 0.0, 128
        %875 = vxpose.xlu0.b32.cont [13/16] 0.0, 128
        %876 = vxpose.xlu0.b32.cont [14/16] 0.0, 128
        %877 = vxpose.xlu0.b32.cont [15/16] 0.0, 128
        %878 = vxpose.xlu0.b32.end [16/16] 0.0, 128
        %v879 = vpop.trf.xlu0
        %v880 = vpop.trf.xlu0
        %v881 = vpop.trf.xlu0
        %v882 = vpop.trf.xlu0
        %v883 = vpop.trf.xlu0
        %v884 = vpop.trf.xlu0
        %v885 = vpop.trf.xlu0
        %v886 = vpop.trf.xlu0
        %v887 = vpop.trf.xlu0
        %v888 = vpop.trf.xlu0
        %v889 = vpop.trf.xlu0
        %v890 = vpop.trf.xlu0
        %v891 = vpop.trf.xlu0
        %v892 = vpop.trf.xlu0
        %v893 = vpop.trf.xlu0
        %v894 = vpop.trf.xlu0
        %895 = vxpose.xlu0.b32.start [1/16] %v817, 128
        %896 = vxpose.xlu0.b32.cont [2/16] %v819, 128
        %897 = vxpose.xlu0.b32.cont [3/16] %v821, 128
        %898 = vxpose.xlu0.b32.cont [4/16] 0.0, 128
        %899 = vxpose.xlu0.b32.cont [5/16] 0.0, 128
        %900 = vxpose.xlu0.b32.cont [6/16] 0.0, 128
        %901 = vxpose.xlu0.b32.cont [7/16] 0.0, 128
        %902 = vxpose.xlu0.b32.cont [8/16] 0.0, 128
        %903 = vxpose.xlu0.b32.cont [9/16] 0.0, 128
        %904 = vxpose.xlu0.b32.cont [10/16] 0.0, 128
        %905 = vxpose.xlu0.b32.cont [11/16] 0.0, 128
        %906 = vxpose.xlu0.b32.cont [12/16] 0.0, 128
        %907 = vxpose.xlu0.b32.cont [13/16] 0.0, 128
        %908 = vxpose.xlu0.b32.cont [14/16] 0.0, 128
        %909 = vxpose.xlu0.b32.cont [15/16] 0.0, 128
        %910 = vxpose.xlu0.b32.end [16/16] 0.0, 128
        %v911 = vpop.trf.xlu0
        %v912 = vpop.trf.xlu0
        %v913 = vpop.trf.xlu0
        %v914 = vpop.trf.xlu0
        %v915 = vpop.trf.xlu0
        %v916 = vpop.trf.xlu0
        %v917 = vpop.trf.xlu0
        %v918 = vpop.trf.xlu0
        %v919 = vpop.trf.xlu0
        %v920 = vpop.trf.xlu0
        %v921 = vpop.trf.xlu0
        %v922 = vpop.trf.xlu0
        %v923 = vpop.trf.xlu0
        %v924 = vpop.trf.xlu0
        %v925 = vpop.trf.xlu0
        %v926 = vpop.trf.xlu0
        %vm927 = vcmask 195584
        %v929 = vsel %vm927, %v879, 0
        %v932 = vsel %vm927, %v880, 0
        %v935 = vsel %vm927, %v881, 0
        %v938 = vsel %vm927, %v882, 0
        %v941 = vsel %vm927, %v883, 0
        %v944 = vsel %vm927, %v884, 0
        %v947 = vsel %vm927, %v885, 0
        %v950 = vsel %vm927, %v886, 0
        %v953 = vsel %vm927, %v887, 0
        %v956 = vsel %vm927, %v888, 0
        %v959 = vsel %vm927, %v889, 0
        %v962 = vsel %vm927, %v890, 0
        %v965 = vsel %vm927, %v891, 0
        %v968 = vsel %vm927, %v892, 0
        %v971 = vsel %vm927, %v893, 0
        %v974 = vsel %vm927, %v894, 0
        %v977 = vsel %vm927, %v911, 0
        %v980 = vsel %vm927, %v912, 0
        %v983 = vsel %vm927, %v913, 0
        %v986 = vsel %vm927, %v914, 0
        %v989 = vsel %vm927, %v915, 0
        %v992 = vsel %vm927, %v916, 0
        %v995 = vsel %vm927, %v917, 0
        %v998 = vsel %vm927, %v918, 0
        %v1001 = vsel %vm927, %v919, 0
        %v1004 = vsel %vm927, %v920, 0
        %v1007 = vsel %vm927, %v921, 0
        %v1010 = vsel %vm927, %v922, 0
        %v1013 = vsel %vm927, %v923, 0
        %v1016 = vsel %vm927, %v924, 0
        %v1019 = vsel %vm927, %v925, 0
        %v1022 = vsel %vm927, %v926, 0
        %1024 = vmatprep.subr.mxu0 0.0
        %1025 = vmatpush1.msra.mxu0 %v860
        %1026 = vmatprep.subr.mxu0 0.0
        %1027 = vmatpush1.msra.mxu0 %v861
        %1028 = vmatprep.subr.mxu0 0.0
        %1029 = vmatpush1.msra.mxu0 %v862
        %1030 = vmatprep.subr.mxu0 0.0
        %1031 = vmatpush1.msra.mxu0 0.0
        %1032 = vmatprep.subr.mxu0 0.0
        %1033 = vmatpush1.msra.mxu0 0.0
        %1034 = vmatprep.subr.mxu0 0.0
        %1035 = vmatpush1.msra.mxu0 0.0
        %1036 = vmatprep.subr.mxu0 0.0
        %1037 = vmatpush1.msra.mxu0 0.0
        %1038 = vmatprep.subr.mxu0 0.0
        %1039 = vmatpush1.msra.mxu0 0.0
        %1040 = vmatprep.subr.mxu0 0.0
        %1041 = vmatpush1.msra.mxu0 0.0
        %1042 = vmatprep.subr.mxu0 0.0
        %1043 = vmatpush1.msra.mxu0 0.0
        %1044 = vmatprep.subr.mxu0 0.0
        %1045 = vmatpush1.msra.mxu0 0.0
        %1046 = vmatprep.subr.mxu0 0.0
        %1047 = vmatpush1.msra.mxu0 0.0
        %1048 = vmatprep.subr.mxu0 0.0
        %1049 = vmatpush1.msra.mxu0 0.0
        %1050 = vmatprep.subr.mxu0 0.0
        %1051 = vmatpush1.msra.mxu0 0.0
        %1052 = vmatprep.subr.mxu0 0.0
        %1053 = vmatpush1.msra.mxu0 0.0
        %1054 = vmatprep.subr.mxu0 0.0
        %1055 = vmatpush1.msra.mxu0 0.0
        %1056 = vmatprep.subr.mxu0 0.0
        %1057 = vmatpush1.msra.mxu0 0.0
        %1058 = vmatprep.subr.mxu0 0.0
        %1059 = vmatpush1.msra.mxu0 0.0
        %1060 = vmatprep.subr.mxu0 0.0
        %1061 = vmatpush1.msra.mxu0 0.0
        %1062 = vmatprep.subr.mxu0 0.0
        %1063 = vmatpush1.msra.mxu0 0.0
        %1064 = vmatprep.subr.mxu0 0.0
        %1065 = vmatpush1.msra.mxu0 0.0
        %1066 = vmatprep.subr.mxu0 0.0
        %1067 = vmatpush1.msra.mxu0 0.0
        %1068 = vmatprep.subr.mxu0 0.0
        %1069 = vmatpush1.msra.mxu0 0.0
        %1070 = vmatprep.subr.mxu0 0.0
        %1071 = vmatpush1.msra.mxu0 0.0
        %1072 = vmatprep.subr.mxu0 0.0
        %1073 = vmatpush1.msra.mxu0 0.0
        %1074 = vmatprep.subr.mxu0 0.0
        %1075 = vmatpush1.msra.mxu0 0.0
        %1076 = vmatprep.subr.mxu0 0.0
        %1077 = vmatpush1.msra.mxu0 0.0
        %1078 = vmatprep.subr.mxu0 0.0
        %1079 = vmatpush1.msra.mxu0 0.0
        %1080 = vmatprep.subr.mxu0 0.0
        %1081 = vmatpush1.msra.mxu0 0.0
        %1082 = vmatprep.subr.mxu0 0.0
        %1083 = vmatpush1.msra.mxu0 0.0
        %1084 = vmatprep.subr.mxu0 0.0
        %1085 = vmatpush1.msra.mxu0 0.0
        %1086 = vmatprep.subr.mxu0 0.0
        %1087 = vmatpush1.msra.mxu0 0.0
        %1088 = vmatprep.mubr.f32.mxu0 0.0
        %1089 = vmatmul.mubr.f32.gmra.mrb[0].mxu0 %v929
        %v1090 = vpop.f32.mrb[0].mxu0
        %v1091 = vadd.f32 %v828, %v1090
        %v1092 = vpop.f32.mrb[0].mxu0
        %1093 = vmatprep.mubr.f32.mxu0 0.0
        %1094 = vmatmul.mubr.f32.gmra.mrb[0].mxu0 %v932
        %v1095 = vpop.f32.mrb[0].mxu0
        %v1096 = vadd.f32 %v829, %v1095
        %v1097 = vpop.f32.mrb[0].mxu0
        %1098 = vmatprep.mubr.f32.mxu0 0.0
        %1099 = vmatmul.mubr.f32.gmra.mrb[0].mxu0 %v935
        %v1100 = vpop.f32.mrb[0].mxu0
        %v1101 = vadd.f32 %v830, %v1100
        %v1102 = vpop.f32.mrb[0].mxu0
        %1103 = vmatprep.mubr.f32.mxu0 0.0
        %1104 = vmatmul.mubr.f32.gmra.mrb[0].mxu0 %v938
        %v1105 = vpop.f32.mrb[0].mxu0
        %v1106 = vadd.f32 %v831, %v1105
        %v1107 = vpop.f32.mrb[0].mxu0
        %1108 = vmatprep.mubr.f32.mxu0 0.0
        %1109 = vmatmul.mubr.f32.gmra.mrb[0].mxu0 %v941
        %v1110 = vpop.f32.mrb[0].mxu0
        %v1111 = vadd.f32 %v832, %v1110
        %v1112 = vpop.f32.mrb[0].mxu0
        %1113 = vmatprep.mubr.f32.mxu0 0.0
        %1114 = vmatmul.mubr.f32.gmra.mrb[0].mxu0 %v944
        %v1115 = vpop.f32.mrb[0].mxu0
        %v1116 = vadd.f32 %v833, %v1115
        %v1117 = vpop.f32.mrb[0].mxu0
        %1118 = vmatprep.mubr.f32.mxu0 0.0
        %1119 = vmatmul.mubr.f32.gmra.mrb[0].mxu0 %v947
        %v1120 = vpop.f32.mrb[0].mxu0
        %v1121 = vadd.f32 %v834, %v1120
        %v1122 = vpop.f32.mrb[0].mxu0
        %1123 = vmatprep.mubr.f32.mxu0 0.0
        %1124 = vmatmul.mubr.f32.gmra.mrb[0].mxu0 %v950
        %v1125 = vpop.f32.mrb[0].mxu0
        %v1126 = vadd.f32 %v835, %v1125
        %v1127 = vpop.f32.mrb[0].mxu0
        %1128 = vmatprep.mubr.f32.mxu0 0.0
        %1129 = vmatmul.mubr.f32.gmra.mrb[0].mxu0 %v953
        %v1130 = vpop.f32.mrb[0].mxu0
        %v1131 = vadd.f32 %v836, %v1130
        %v1132 = vpop.f32.mrb[0].mxu0
        %1133 = vmatprep.mubr.f32.mxu0 0.0
        %1134 = vmatmul.mubr.f32.gmra.mrb[0].mxu0 %v956
        %v1135 = vpop.f32.mrb[0].mxu0
        %v1136 = vadd.f32 %v837, %v1135
        %v1137 = vpop.f32.mrb[0].mxu0
        %1138 = vmatprep.mubr.f32.mxu0 0.0
        %1139 = vmatmul.mubr.f32.gmra.mrb[0].mxu0 %v959
        %v1140 = vpop.f32.mrb[0].mxu0
        %v1141 = vadd.f32 %v838, %v1140
        %v1142 = vpop.f32.mrb[0].mxu0
        %1143 = vmatprep.mubr.f32.mxu0 0.0
        %1144 = vmatmul.mubr.f32.gmra.mrb[0].mxu0 %v962
        %v1145 = vpop.f32.mrb[0].mxu0
        %v1146 = vadd.f32 %v839, %v1145
        %v1147 = vpop.f32.mrb[0].mxu0
        %1148 = vmatprep.mubr.f32.mxu0 0.0
        %1149 = vmatmul.mubr.f32.gmra.mrb[0].mxu0 %v965
        %v1150 = vpop.f32.mrb[0].mxu0
        %v1151 = vadd.f32 %v840, %v1150
        %v1152 = vpop.f32.mrb[0].mxu0
        %1153 = vmatprep.mubr.f32.mxu0 0.0
        %1154 = vmatmul.mubr.f32.gmra.mrb[0].mxu0 %v968
        %v1155 = vpop.f32.mrb[0].mxu0
        %v1156 = vadd.f32 %v841, %v1155
        %v1157 = vpop.f32.mrb[0].mxu0
        %1158 = vmatprep.mubr.f32.mxu0 0.0
        %1159 = vmatmul.mubr.f32.gmra.mrb[0].mxu0 %v971
        %v1160 = vpop.f32.mrb[0].mxu0
        %v1161 = vadd.f32 %v842, %v1160
        %v1162 = vpop.f32.mrb[0].mxu0
        %1163 = vmatprep.mubr.f32.mxu0 0.0
        %1164 = vmatmul.mubr.f32.gmra.mrb[0].mxu0 %v974
        %v1165 = vpop.f32.mrb[0].mxu0
        %v1166 = vadd.f32 %v843, %v1165
        %v1167 = vpop.f32.mrb[0].mxu0
        %1168 = vmatprep.mubr.f32.mxu0 0.0
        %1169 = vmatmul.mubr.f32.gmra.mrb[0].mxu0 %v977
        %v1170 = vpop.f32.mrb[0].mxu0
        %v1171 = vadd.f32 %v844, %v1170
        %v1172 = vpop.f32.mrb[0].mxu0
        %1173 = vmatprep.mubr.f32.mxu0 0.0
        %1174 = vmatmul.mubr.f32.gmra.mrb[0].mxu0 %v980
        %v1175 = vpop.f32.mrb[0].mxu0
        %v1176 = vadd.f32 %v845, %v1175
        %v1177 = vpop.f32.mrb[0].mxu0
        %1178 = vmatprep.mubr.f32.mxu0 0.0
        %1179 = vmatmul.mubr.f32.gmra.mrb[0].mxu0 %v983
        %v1180 = vpop.f32.mrb[0].mxu0
        %v1181 = vadd.f32 %v846, %v1180
        %v1182 = vpop.f32.mrb[0].mxu0
        %1183 = vmatprep.mubr.f32.mxu0 0.0
        %1184 = vmatmul.mubr.f32.gmra.mrb[0].mxu0 %v986
        %v1185 = vpop.f32.mrb[0].mxu0
        %v1186 = vadd.f32 %v847, %v1185
        %v1187 = vpop.f32.mrb[0].mxu0
        %1188 = vmatprep.mubr.f32.mxu0 0.0
        %1189 = vmatmul.mubr.f32.gmra.mrb[0].mxu0 %v989
        %v1190 = vpop.f32.mrb[0].mxu0
        %v1191 = vadd.f32 %v848, %v1190
        %v1192 = vpop.f32.mrb[0].mxu0
        %1193 = vmatprep.mubr.f32.mxu0 0.0
        %1194 = vmatmul.mubr.f32.gmra.mrb[0].mxu0 %v992
        %v1195 = vpop.f32.mrb[0].mxu0
        %v1196 = vadd.f32 %v849, %v1195
        %v1197 = vpop.f32.mrb[0].mxu0
        %1198 = vmatprep.mubr.f32.mxu0 0.0
        %1199 = vmatmul.mubr.f32.gmra.mrb[0].mxu0 %v995
        %v1200 = vpop.f32.mrb[0].mxu0
        %v1201 = vadd.f32 %v850, %v1200
        %v1202 = vpop.f32.mrb[0].mxu0
        %1203 = vmatprep.mubr.f32.mxu0 0.0
        %1204 = vmatmul.mubr.f32.gmra.mrb[0].mxu0 %v998
        %v1205 = vpop.f32.mrb[0].mxu0
        %v1206 = vadd.f32 %v851, %v1205
        %v1207 = vpop.f32.mrb[0].mxu0
        %1208 = vmatprep.mubr.f32.mxu0 0.0
        %1209 = vmatmul.mubr.f32.gmra.mrb[0].mxu0 %v1001
        %v1210 = vpop.f32.mrb[0].mxu0
        %v1211 = vadd.f32 %v852, %v1210
        %v1212 = vpop.f32.mrb[0].mxu0
        %1213 = vmatprep.mubr.f32.mxu0 0.0
        %1214 = vmatmul.mubr.f32.gmra.mrb[0].mxu0 %v1004
        %v1215 = vpop.f32.mrb[0].mxu0
        %v1216 = vadd.f32 %v853, %v1215
        %v1217 = vpop.f32.mrb[0].mxu0
        %1218 = vmatprep.mubr.f32.mxu0 0.0
        %1219 = vmatmul.mubr.f32.gmra.mrb[0].mxu0 %v1007
        %v1220 = vpop.f32.mrb[0].mxu0
        %v1221 = vadd.f32 %v854, %v1220
        %v1222 = vpop.f32.mrb[0].mxu0
        %1223 = vmatprep.mubr.f32.mxu0 0.0
        %1224 = vmatmul.mubr.f32.gmra.mrb[0].mxu0 %v1010
        %v1225 = vpop.f32.mrb[0].mxu0
        %v1226 = vadd.f32 %v855, %v1225
        %v1227 = vpop.f32.mrb[0].mxu0
        %1228 = vmatprep.mubr.f32.mxu0 0.0
        %1229 = vmatmul.mubr.f32.gmra.mrb[0].mxu0 %v1013
        %v1230 = vpop.f32.mrb[0].mxu0
        %v1231 = vadd.f32 %v856, %v1230
        %v1232 = vpop.f32.mrb[0].mxu0
        %1233 = vmatprep.mubr.f32.mxu0 0.0
        %1234 = vmatmul.mubr.f32.gmra.mrb[0].mxu0 %v1016
        %v1235 = vpop.f32.mrb[0].mxu0
        %v1236 = vadd.f32 %v857, %v1235
        %v1237 = vpop.f32.mrb[0].mxu0
        %1238 = vmatprep.mubr.f32.mxu0 0.0
        %1239 = vmatmul.mubr.f32.gmra.mrb[0].mxu0 %v1019
        %v1240 = vpop.f32.mrb[0].mxu0
        %v1241 = vadd.f32 %v858, %v1240
        %v1242 = vpop.f32.mrb[0].mxu0
        %1243 = vmatprep.mubr.f32.mxu0 0.0
        %1244 = vmatmul.mubr.f32.gmra.mrb[0].mxu0 %v1022
        %v1245 = vpop.f32.mrb[0].mxu0
        %v1246 = vadd.f32 %v859, %v1245
        %v1247 = vpop.f32.mrb[0].mxu0
        %1248 = vdwg.mxu0
        %v1249 = vmax.f32 %v1091, 0.0
        %v1250 = vmax.f32 %v1096, 0.0
        %v1251 = vmax.f32 %v1101, 0.0
        %v1252 = vmax.f32 %v1106, 0.0
        %v1253 = vmax.f32 %v1111, 0.0
        %v1254 = vmax.f32 %v1116, 0.0
        %v1255 = vmax.f32 %v1121, 0.0
        %v1256 = vmax.f32 %v1126, 0.0
        %v1257 = vmax.f32 %v1131, 0.0
        %v1258 = vmax.f32 %v1136, 0.0
        %v1259 = vmax.f32 %v1141, 0.0
        %v1260 = vmax.f32 %v1146, 0.0
        %v1261 = vmax.f32 %v1151, 0.0
        %v1262 = vmax.f32 %v1156, 0.0
        %v1263 = vmax.f32 %v1161, 0.0
        %v1264 = vmax.f32 %v1166, 0.0
        %v1265 = vmax.f32 %v1171, 0.0
        %v1266 = vmax.f32 %v1176, 0.0
        %v1267 = vmax.f32 %v1181, 0.0
        %v1268 = vmax.f32 %v1186, 0.0
        %v1269 = vmax.f32 %v1191, 0.0
        %v1270 = vmax.f32 %v1196, 0.0
        %v1271 = vmax.f32 %v1201, 0.0
        %v1272 = vmax.f32 %v1206, 0.0
        %v1273 = vmax.f32 %v1211, 0.0
        %v1274 = vmax.f32 %v1216, 0.0
        %v1275 = vmax.f32 %v1221, 0.0
        %v1276 = vmax.f32 %v1226, 0.0
        %v1277 = vmax.f32 %v1231, 0.0
        %v1278 = vmax.f32 %v1236, 0.0
        %v1279 = vmax.f32 %v1241, 0.0
        %v1280 = vmax.f32 %v1246, 0.0
        %v1281 = vadd.f32 %v1249, 1e-07
        %v1282 = vadd.f32 %v1250, 1e-07
        %v1283 = vadd.f32 %v1251, 1e-07
        %v1284 = vadd.f32 %v1252, 1e-07
        %v1285 = vadd.f32 %v1253, 1e-07
        %v1286 = vadd.f32 %v1254, 1e-07
        %v1287 = vadd.f32 %v1255, 1e-07
        %v1288 = vadd.f32 %v1256, 1e-07
        %v1289 = vadd.f32 %v1257, 1e-07
        %v1290 = vadd.f32 %v1258, 1e-07
        %v1291 = vadd.f32 %v1259, 1e-07
        %v1292 = vadd.f32 %v1260, 1e-07
        %v1293 = vadd.f32 %v1261, 1e-07
        %v1294 = vadd.f32 %v1262, 1e-07
        %v1295 = vadd.f32 %v1263, 1e-07
        %v1296 = vadd.f32 %v1264, 1e-07
        %v1297 = vadd.f32 %v1265, 1e-07
        %v1298 = vadd.f32 %v1266, 1e-07
        %v1299 = vadd.f32 %v1267, 1e-07
        %v1300 = vadd.f32 %v1268, 1e-07
        %v1301 = vadd.f32 %v1269, 1e-07
        %v1302 = vadd.f32 %v1270, 1e-07
        %v1303 = vadd.f32 %v1271, 1e-07
        %v1304 = vadd.f32 %v1272, 1e-07
        %v1305 = vadd.f32 %v1273, 1e-07
        %v1306 = vadd.f32 %v1274, 1e-07
        %v1307 = vadd.f32 %v1275, 1e-07
        %v1308 = vadd.f32 %v1276, 1e-07
        %v1309 = vadd.f32 %v1277, 1e-07
        %v1310 = vadd.f32 %v1278, 1e-07
        %v1311 = vadd.f32 %v1279, 1e-07
        %v1312 = vadd.f32 %v1280, 1e-07
        %v1313 = vlaneseq
        %v1314 = vshrl.u32 %v1313, 7
        %v1315 = vsub.s32 6, %v1314
        %v1316 = vrot.slane %v558, %v1315
        %v1317 = vmul.f32 %v1281, %v1316
        %v1318 = vmul.f32 %v1282, %v1316
        %v1319 = vmul.f32 %v1283, %v1316
        %v1320 = vmul.f32 %v1284, %v1316
        %v1321 = vmul.f32 %v1285, %v1316
        %v1322 = vmul.f32 %v1286, %v1316
        %v1323 = vmul.f32 %v1287, %v1316
        %v1324 = vmul.f32 %v1288, %v1316
        %v1325 = vmul.f32 %v1289, %v1316
        %v1326 = vmul.f32 %v1290, %v1316
        %v1327 = vmul.f32 %v1291, %v1316
        %v1328 = vmul.f32 %v1292, %v1316
        %v1329 = vmul.f32 %v1293, %v1316
        %v1330 = vmul.f32 %v1294, %v1316
        %v1331 = vmul.f32 %v1295, %v1316
        %v1332 = vmul.f32 %v1296, %v1316
        %v1333 = vmul.f32 %v1297, %v1316
        %v1334 = vmul.f32 %v1298, %v1316
        %v1335 = vmul.f32 %v1299, %v1316
        %v1336 = vmul.f32 %v1300, %v1316
        %v1337 = vmul.f32 %v1301, %v1316
        %v1338 = vmul.f32 %v1302, %v1316
        %v1339 = vmul.f32 %v1303, %v1316
        %v1340 = vmul.f32 %v1304, %v1316
        %v1341 = vmul.f32 %v1305, %v1316
        %v1342 = vmul.f32 %v1306, %v1316
        %v1343 = vmul.f32 %v1307, %v1316
        %v1344 = vmul.f32 %v1308, %v1316
        %v1345 = vmul.f32 %v1309, %v1316
        %v1346 = vmul.f32 %v1310, %v1316
        %v1347 = vmul.f32 %v1311, %v1316
        %v1348 = vmul.f32 %v1312, %v1316
        %v1349 = vld [vmem:[#allocation4] sm:$0x1]
        %v1350 = vmax.f32 %v1317, %v1321
        %v1351 = vmax.f32 %v1318, %v1322
        %v1352 = vmax.f32 %v1319, %v1323
        %v1353 = vmax.f32 %v1320, %v1324
        %v1354 = vmax.f32 %v1350, %v1325
        %v1355 = vmax.f32 %v1351, %v1326
        %v1356 = vmax.f32 %v1352, %v1327
        %v1357 = vmax.f32 %v1353, %v1328
        %v1358 = vmax.f32 %v1354, %v1329
        %v1359 = vmax.f32 %v1355, %v1330
        %v1360 = vmax.f32 %v1356, %v1331
        %v1361 = vmax.f32 %v1357, %v1332
        %v1362 = vmax.f32 %v1358, %v1333
        %v1363 = vmax.f32 %v1359, %v1334
        %v1364 = vmax.f32 %v1360, %v1335
        %v1365 = vmax.f32 %v1361, %v1336
        %v1366 = vmax.f32 %v1362, %v1337
        %v1367 = vmax.f32 %v1363, %v1338
        %v1368 = vmax.f32 %v1364, %v1339
        %v1369 = vmax.f32 %v1365, %v1340
        %v1370 = vmax.f32 %v1366, %v1341
        %v1371 = vmax.f32 %v1367, %v1342
        %v1372 = vmax.f32 %v1368, %v1343
        %v1373 = vmax.f32 %v1369, %v1344
        %v1374 = vmax.f32 %v1370, %v1345
        %v1375 = vmax.f32 %v1371, %v1346
        %v1376 = vmax.f32 %v1372, %v1347
        %v1377 = vmax.f32 %v1373, %v1348
        %v1378 = vmax.f32 %v1374, %v1375
        %v1379 = vmax.f32 %v1376, %v1377
        %v1380 = vmax.f32 %v1378, %v1379
        %v1381 = vrot.slane %v1380, 4
        %v1382 = vmax.f32 %v1380, %v1381
        %v1383 = vrot.slane %v1382, 2
        %v1384 = vmax.f32 %v1382, %v1383
        %v1385 = vrot.slane %v1384, 1
        %v1386 = vmax.f32 %v1384, %v1385
        %v1387 = vmax.f32 %v1349, %v1386
        %v1388 = vsub.f32 %v1349, %v1387
        %v1389 = vmul.f32 %v1388, 1.442695
        %v1390 = vpow.pop %v1389
        %v1392 = vlaneseq
        %v1393 = vshrl.u32 %v1392, 7
        %v1394 = vsub.s32 0, %v1393
        %v1395 = vrot.slane %v1387, %v1394
        %v1397 = vsub.f32 %v1317, %v1395
        %v1398 = vsub.f32 %v1318, %v1395
        %v1399 = vsub.f32 %v1319, %v1395
        %v1400 = vsub.f32 %v1320, %v1395
        %v1401 = vsub.f32 %v1321, %v1395
        %v1402 = vsub.f32 %v1322, %v1395
        %v1403 = vsub.f32 %v1323, %v1395
        %v1404 = vsub.f32 %v1324, %v1395
        %v1405 = vsub.f32 %v1325, %v1395
        %v1406 = vsub.f32 %v1326, %v1395
        %v1407 = vsub.f32 %v1327, %v1395
        %v1408 = vsub.f32 %v1328, %v1395
        %v1409 = vsub.f32 %v1329, %v1395
        %v1410 = vsub.f32 %v1330, %v1395
        %v1411 = vsub.f32 %v1331, %v1395
        %v1412 = vsub.f32 %v1332, %v1395
        %v1413 = vsub.f32 %v1333, %v1395
        %v1414 = vsub.f32 %v1334, %v1395
        %v1415 = vsub.f32 %v1335, %v1395
        %v1416 = vsub.f32 %v1336, %v1395
        %v1417 = vsub.f32 %v1337, %v1395
        %v1418 = vsub.f32 %v1338, %v1395
        %v1419 = vsub.f32 %v1339, %v1395
        %v1420 = vsub.f32 %v1340, %v1395
        %v1421 = vsub.f32 %v1341, %v1395
        %v1422 = vsub.f32 %v1342, %v1395
        %v1423 = vsub.f32 %v1343, %v1395
        %v1424 = vsub.f32 %v1344, %v1395
        %v1425 = vsub.f32 %v1345, %v1395
        %v1426 = vsub.f32 %v1346, %v1395
        %v1427 = vsub.f32 %v1347, %v1395
        %v1428 = vsub.f32 %v1348, %v1395
        %v1429 = vmul.f32 %v1397, 1.442695
        %v1430 = vpow.pop %v1429
        %v1431 = vmul.f32 %v1398, 1.442695
        %v1432 = vpow.pop %v1431
        %v1433 = vmul.f32 %v1399, 1.442695
        %v1434 = vpow.pop %v1433
        %v1435 = vmul.f32 %v1400, 1.442695
        %v1436 = vpow.pop %v1435
        %v1437 = vmul.f32 %v1401, 1.442695
        %v1438 = vpow.pop %v1437
        %v1439 = vmul.f32 %v1402, 1.442695
        %v1440 = vpow.pop %v1439
        %v1441 = vmul.f32 %v1403, 1.442695
        %v1442 = vpow.pop %v1441
        %v1443 = vmul.f32 %v1404, 1.442695
        %v1444 = vpow.pop %v1443
        %v1445 = vmul.f32 %v1405, 1.442695
        %v1446 = vpow.pop %v1445
        %v1447 = vmul.f32 %v1406, 1.442695
        %v1448 = vpow.pop %v1447
        %v1449 = vmul.f32 %v1407, 1.442695
        %v1450 = vpow.pop %v1449
        %v1451 = vmul.f32 %v1408, 1.442695
        %v1452 = vpow.pop %v1451
        %v1453 = vmul.f32 %v1409, 1.442695
        %v1454 = vpow.pop %v1453
        %v1455 = vmul.f32 %v1410, 1.442695
        %v1456 = vpow.pop %v1455
        %v1457 = vmul.f32 %v1411, 1.442695
        %v1458 = vpow.pop %v1457
        %v1459 = vmul.f32 %v1412, 1.442695
        %v1460 = vpow.pop %v1459
        %v1461 = vmul.f32 %v1413, 1.442695
        %v1462 = vpow.pop %v1461
        %v1463 = vmul.f32 %v1414, 1.442695
        %v1464 = vpow.pop %v1463
        %v1465 = vmul.f32 %v1415, 1.442695
        %v1466 = vpow.pop %v1465
        %v1467 = vmul.f32 %v1416, 1.442695
        %v1468 = vpow.pop %v1467
        %v1469 = vmul.f32 %v1417, 1.442695
        %v1470 = vpow.pop %v1469
        %v1471 = vmul.f32 %v1418, 1.442695
        %v1472 = vpow.pop %v1471
        %v1473 = vmul.f32 %v1419, 1.442695
        %v1474 = vpow.pop %v1473
        %v1475 = vmul.f32 %v1420, 1.442695
        %v1476 = vpow.pop %v1475
        %v1477 = vmul.f32 %v1421, 1.442695
        %v1478 = vpow.pop %v1477
        %v1479 = vmul.f32 %v1422, 1.442695
        %v1480 = vpow.pop %v1479
        %v1481 = vmul.f32 %v1423, 1.442695
        %v1482 = vpow.pop %v1481
        %v1483 = vmul.f32 %v1424, 1.442695
        %v1484 = vpow.pop %v1483
        %v1485 = vmul.f32 %v1425, 1.442695
        %v1486 = vpow.pop %v1485
        %v1487 = vmul.f32 %v1426, 1.442695
        %v1488 = vpow.pop %v1487
        %v1489 = vmul.f32 %v1427, 1.442695
        %v1490 = vpow.pop %v1489
        %v1491 = vmul.f32 %v1428, 1.442695
        %v1492 = vpow.pop %v1491
        %v1493 = vmul.f32 %v1430, %v1281
        %v1494 = vmul.f32 %v1432, %v1282
        %v1495 = vmul.f32 %v1434, %v1283
        %v1496 = vmul.f32 %v1436, %v1284
        %v1497 = vmul.f32 %v1438, %v1285
        %v1498 = vmul.f32 %v1440, %v1286
        %v1499 = vmul.f32 %v1442, %v1287
        %v1500 = vmul.f32 %v1444, %v1288
        %v1501 = vmul.f32 %v1446, %v1289
        %v1502 = vmul.f32 %v1448, %v1290
        %v1503 = vmul.f32 %v1450, %v1291
        %v1504 = vmul.f32 %v1452, %v1292
        %v1505 = vmul.f32 %v1454, %v1293
        %v1506 = vmul.f32 %v1456, %v1294
        %v1507 = vmul.f32 %v1458, %v1295
        %v1508 = vmul.f32 %v1460, %v1296
        %v1509 = vmul.f32 %v1462, %v1297
        %v1510 = vmul.f32 %v1464, %v1298
        %v1511 = vmul.f32 %v1466, %v1299
        %v1512 = vmul.f32 %v1468, %v1300
        %v1513 = vmul.f32 %v1470, %v1301
        %v1514 = vmul.f32 %v1472, %v1302
        %v1515 = vmul.f32 %v1474, %v1303
        %v1516 = vmul.f32 %v1476, %v1304
        %v1517 = vmul.f32 %v1478, %v1305
        %v1518 = vmul.f32 %v1480, %v1306
        %v1519 = vmul.f32 %v1482, %v1307
        %v1520 = vmul.f32 %v1484, %v1308
        %v1521 = vmul.f32 %v1486, %v1309
        %v1522 = vmul.f32 %v1488, %v1310
        %v1523 = vmul.f32 %v1490, %v1311
        %v1524 = vmul.f32 %v1492, %v1312
        %1525 = vmatprep.subr.mxu0 0.0
        %1526 = vmatpush1.msra.mxu0 %v1430
        %1527 = vmatprep.subr.mxu0 0.0
        %1528 = vmatpush1.msra.mxu0 %v1432
        %1529 = vmatprep.subr.mxu0 0.0
        %1530 = vmatpush1.msra.mxu0 %v1434
        %1531 = vmatprep.subr.mxu0 0.0
        %1532 = vmatpush1.msra.mxu0 %v1436
        %1533 = vmatprep.subr.mxu0 0.0
        %1534 = vmatpush1.msra.mxu0 %v1438
        %1535 = vmatprep.subr.mxu0 0.0
        %1536 = vmatpush1.msra.mxu0 %v1440
        %1537 = vmatprep.subr.mxu0 0.0
        %1538 = vmatpush1.msra.mxu0 %v1442
        %1539 = vmatprep.subr.mxu0 0.0
        %1540 = vmatpush1.msra.mxu0 %v1444
        %1541 = vmatprep.subr.mxu0 0.0
        %1542 = vmatpush1.msra.mxu0 %v1446
        %1543 = vmatprep.subr.mxu0 0.0
        %1544 = vmatpush1.msra.mxu0 %v1448
        %1545 = vmatprep.subr.mxu0 0.0
        %1546 = vmatpush1.msra.mxu0 %v1450
        %1547 = vmatprep.subr.mxu0 0.0
        %1548 = vmatpush1.msra.mxu0 %v1452
        %1549 = vmatprep.subr.mxu0 0.0
        %1550 = vmatpush1.msra.mxu0 %v1454
        %1551 = vmatprep.subr.mxu0 0.0
        %1552 = vmatpush1.msra.mxu0 %v1456
        %1553 = vmatprep.subr.mxu0 0.0
        %1554 = vmatpush1.msra.mxu0 %v1458
        %1555 = vmatprep.subr.mxu0 0.0
        %1556 = vmatpush1.msra.mxu0 %v1460
        %1557 = vmatprep.subr.mxu0 0.0
        %1558 = vmatpush1.msra.mxu0 %v1462
        %1559 = vmatprep.subr.mxu0 0.0
        %1560 = vmatpush1.msra.mxu0 %v1464
        %1561 = vmatprep.subr.mxu0 0.0
        %1562 = vmatpush1.msra.mxu0 %v1466
        %1563 = vmatprep.subr.mxu0 0.0
        %1564 = vmatpush1.msra.mxu0 %v1468
        %1565 = vmatprep.subr.mxu0 0.0
        %1566 = vmatpush1.msra.mxu0 %v1470
        %1567 = vmatprep.subr.mxu0 0.0
        %1568 = vmatpush1.msra.mxu0 %v1472
        %1569 = vmatprep.subr.mxu0 0.0
        %1570 = vmatpush1.msra.mxu0 %v1474
        %1571 = vmatprep.subr.mxu0 0.0
        %1572 = vmatpush1.msra.mxu0 %v1476
        %1573 = vmatprep.subr.mxu0 0.0
        %1574 = vmatpush1.msra.mxu0 %v1478
        %1575 = vmatprep.subr.mxu0 0.0
        %1576 = vmatpush1.msra.mxu0 %v1480
        %1577 = vmatprep.subr.mxu0 0.0
        %1578 = vmatpush1.msra.mxu0 %v1482
        %1579 = vmatprep.subr.mxu0 0.0
        %1580 = vmatpush1.msra.mxu0 %v1484
        %1581 = vmatprep.subr.mxu0 0.0
        %1582 = vmatpush1.msra.mxu0 %v1486
        %1583 = vmatprep.subr.mxu0 0.0
        %1584 = vmatpush1.msra.mxu0 %v1488
        %1585 = vmatprep.subr.mxu0 0.0
        %1586 = vmatpush1.msra.mxu0 %v1490
        %1587 = vmatprep.subr.mxu0 0.0
        %1588 = vmatpush1.msra.mxu0 %v1492
        %1589 = vmatprep.mubr.f32.mxu0 %v823
        %1590 = vmatmul.mubr.f32.gmra.mrb[0].mxu0 %v822
        %v1591 = vpop.f32.mrb[0].mxu0
        %v1592 = vadd.f32 0.0, %v1591
        %v1593 = vpop.f32.mrb[0].mxu0
        %1594 = vmatprep.mubr.f32.mxu0 %v825
        %1595 = vmatmul.mubr.f32.gmra.mrb[0].mxu0 %v824
        %v1596 = vpop.f32.mrb[0].mxu0
        %v1597 = vadd.f32 0.0, %v1596
        %v1598 = vpop.f32.mrb[0].mxu0
        %1599 = vmatprep.mubr.f32.mxu0 %v827
        %1600 = vmatmul.mubr.f32.gmra.mrb[0].mxu0 %v826
        %v1601 = vpop.f32.mrb[0].mxu0
        %v1602 = vadd.f32 0.0, %v1601
        %v1603 = vpop.f32.mrb[0].mxu0
        %1604 = vdwg.mxu0
        %1605 = vmatprep.subr.mxu0 0.0
        %1606 = vmatpush1.msra.mxu0 %v1493
        %1607 = vmatprep.subr.mxu0 0.0
        %1608 = vmatpush1.msra.mxu0 %v1494
        %1609 = vmatprep.subr.mxu0 0.0
        %1610 = vmatpush1.msra.mxu0 %v1495
        %1611 = vmatprep.subr.mxu0 0.0
        %1612 = vmatpush1.msra.mxu0 %v1496
        %1613 = vmatprep.subr.mxu0 0.0
        %1614 = vmatpush1.msra.mxu0 %v1497
        %1615 = vmatprep.subr.mxu0 0.0
        %1616 = vmatpush1.msra.mxu0 %v1498
        %1617 = vmatprep.subr.mxu0 0.0
        %1618 = vmatpush1.msra.mxu0 %v1499
        %1619 = vmatprep.subr.mxu0 0.0
        %1620 = vmatpush1.msra.mxu0 %v1500
        %1621 = vmatprep.subr.mxu0 0.0
        %1622 = vmatpush1.msra.mxu0 %v1501
        %1623 = vmatprep.subr.mxu0 0.0
        %1624 = vmatpush1.msra.mxu0 %v1502
        %1625 = vmatprep.subr.mxu0 0.0
        %1626 = vmatpush1.msra.mxu0 %v1503
        %1627 = vmatprep.subr.mxu0 0.0
        %1628 = vmatpush1.msra.mxu0 %v1504
        %1629 = vmatprep.subr.mxu0 0.0
        %1630 = vmatpush1.msra.mxu0 %v1505
        %1631 = vmatprep.subr.mxu0 0.0
        %1632 = vmatpush1.msra.mxu0 %v1506
        %1633 = vmatprep.subr.mxu0 0.0
        %1634 = vmatpush1.msra.mxu0 %v1507
        %1635 = vmatprep.subr.mxu0 0.0
        %1636 = vmatpush1.msra.mxu0 %v1508
        %1637 = vmatprep.subr.mxu0 0.0
        %1638 = vmatpush1.msra.mxu0 %v1509
        %1639 = vmatprep.subr.mxu0 0.0
        %1640 = vmatpush1.msra.mxu0 %v1510
        %1641 = vmatprep.subr.mxu0 0.0
        %1642 = vmatpush1.msra.mxu0 %v1511
        %1643 = vmatprep.subr.mxu0 0.0
        %1644 = vmatpush1.msra.mxu0 %v1512
        %1645 = vmatprep.subr.mxu0 0.0
        %1646 = vmatpush1.msra.mxu0 %v1513
        %1647 = vmatprep.subr.mxu0 0.0
        %1648 = vmatpush1.msra.mxu0 %v1514
        %1649 = vmatprep.subr.mxu0 0.0
        %1650 = vmatpush1.msra.mxu0 %v1515
        %1651 = vmatprep.subr.mxu0 0.0
        %1652 = vmatpush1.msra.mxu0 %v1516
        %1653 = vmatprep.subr.mxu0 0.0
        %1654 = vmatpush1.msra.mxu0 %v1517
        %1655 = vmatprep.subr.mxu0 0.0
        %1656 = vmatpush1.msra.mxu0 %v1518
        %1657 = vmatprep.subr.mxu0 0.0
        %1658 = vmatpush1.msra.mxu0 %v1519
        %1659 = vmatprep.subr.mxu0 0.0
        %1660 = vmatpush1.msra.mxu0 %v1520
        %1661 = vmatprep.subr.mxu0 0.0
        %1662 = vmatpush1.msra.mxu0 %v1521
        %1663 = vmatprep.subr.mxu0 0.0
        %1664 = vmatpush1.msra.mxu0 %v1522
        %1665 = vmatprep.subr.mxu0 0.0
        %1666 = vmatpush1.msra.mxu0 %v1523
        %1667 = vmatprep.subr.mxu0 0.0
        %1668 = vmatpush1.msra.mxu0 %v1524
        %1669 = vmatprep.mubr.f32.mxu0 %v823
        %1670 = vmatmul.mubr.f32.gmra.mrb[0].mxu0 %v822
        %v1671 = vpop.f32.mrb[0].mxu0
        %v1672 = vadd.f32 0.0, %v1671
        %v1673 = vpop.f32.mrb[0].mxu0
        %1674 = vmatprep.mubr.f32.mxu0 %v825
        %1675 = vmatmul.mubr.f32.gmra.mrb[0].mxu0 %v824
        %v1676 = vpop.f32.mrb[0].mxu0
        %v1677 = vadd.f32 0.0, %v1676
        %v1678 = vpop.f32.mrb[0].mxu0
        %1679 = vmatprep.mubr.f32.mxu0 %v827
        %1680 = vmatmul.mubr.f32.gmra.mrb[0].mxu0 %v826
        %v1681 = vpop.f32.mrb[0].mxu0
        %v1682 = vadd.f32 0.0, %v1681
        %v1683 = vpop.f32.mrb[0].mxu0
        %1684 = vdwg.mxu0
        %1685 = vst [vmem:[#allocation4] sm:$0x1] %v1387
        %v1686 = vld [vmem:[#allocation5] sm:$0xff]
        %v1687 = vld [vmem:[#allocation5 + $0x8] sm:$0xff]
        %v1688 = vld [vmem:[#allocation5 + $0x10] sm:$0xff]
        %v1690 = vlaneseq
        %v1691 = vshrl.u32 %v1690, 7
        %v1692 = vsub.s32 0, %v1691
        %v1693 = vrot.slane %v1390, %v1692
        %v1695 = vmul.f32 %v1693, %v1686
        %v1696 = vmul.f32 %v1693, %v1687
        %v1697 = vmul.f32 %v1693, %v1688
        %v1698 = vadd.f32 %v1695, %v1592
        %v1699 = vadd.f32 %v1696, %v1597
        %v1700 = vadd.f32 %v1697, %v1602
        %1701 = vst [vmem:[#allocation5] sm:$0xff] %v1698
        %1702 = vst [vmem:[#allocation5 + $0x8] sm:$0xff] %v1699
        %1703 = vst [vmem:[#allocation5 + $0x10] sm:$0xff] %v1700
        %v1704 = vld [vmem:[#allocation6] sm:$0xff]
        %v1705 = vld [vmem:[#allocation6 + $0x8] sm:$0xff]
        %v1706 = vld [vmem:[#allocation6 + $0x10] sm:$0xff]
        %v1707 = vmul.f32 %v1693, %v1704
        %v1708 = vmul.f32 %v1693, %v1705
        %v1709 = vmul.f32 %v1693, %v1706
        %v1710 = vadd.f32 %v1707, %v1672
        %v1711 = vadd.f32 %v1708, %v1677
        %v1712 = vadd.f32 %v1709, %v1682
        %1713 = vst [vmem:[#allocation6] sm:$0xff] %v1710
        %1714 = vst [vmem:[#allocation6 + $0x8] sm:$0xff] %v1711
        %1715 = vst [vmem:[#allocation6 + $0x10] sm:$0xff] %v1712
        // Predicated region
        $region105: #{tpu_custom_call.1} parent=55 // pred_check
          %p1716 = pneg %p559
        $region106: #{tpu_custom_call.1} parent=55 // pred_check_branch
          %1718 = sbr.rel (%p1716) target = $region108
        $region107: #{tpu_custom_call.1} parent=55 // pred_region
          %v1719 = vld [vmem:[#allocation5] sm:$0xff]
          %v1720 = vld [vmem:[#allocation5 + $0x8] sm:$0xff]
          %v1721 = vld [vmem:[#allocation5 + $0x10] sm:$0xff]
          %v1722 = vadd.f32 %v1719, 1e-16
          %v1723 = vadd.f32 %v1720, 1e-16
          %v1724 = vadd.f32 %v1721, 1e-16
          %v1725 = vrcp.pop %v1722
          %v1726 = vrcp.pop %v1723
          %v1727 = vrcp.pop %v1724
          %v1728 = vld [vmem:[#allocation6] sm:$0xff]
          %v1729 = vld [vmem:[#allocation6 + $0x8] sm:$0xff]
          %v1730 = vld [vmem:[#allocation6 + $0x10] sm:$0xff]
          %v1731 = vmul.f32 %v1728, %v1725
          %v1732 = vmul.f32 %v1729, %v1726
          %v1733 = vmul.f32 %v1730, %v1727
          %v1734 = vld [vmem:[#allocation3] sm:$0xff]
          %v1735 = vld [vmem:[#allocation3 + $0x8] sm:$0xff]
          %v1736 = vld [vmem:[#allocation3 + $0x10] sm:$0xff]
          %v1737 = vadd.f32 %v1731, %v1734
          %v1738 = vadd.f32 %v1732, %v1735
          %v1739 = vadd.f32 %v1733, %v1736
          %v1740 = vld [vmem:[%s501] sm:$0xff]
          %v1741 = vld [vmem:[%s501 + $0x8] sm:$0xff]
          %v1742 = vld [vmem:[%s501 + $0x10] sm:$0xff]
          %v1743 = vld [vmem:[%s501 + $0x18] sm:$0xff]
          %v1744 = vld [vmem:[%s501 + $0x20] sm:$0xff]
          %v1745 = vld [vmem:[%s501 + $0x28] sm:$0xff]
          %v1746 = vld [vmem:[%s501 + $0x30] sm:$0xff]
          %v1747 = vld [vmem:[%s501 + $0x38] sm:$0xff]
          %v1748 = vld [vmem:[%s501 + $0x40] sm:$0xff]
          %v1749 = vld [vmem:[%s501 + $0x48] sm:$0xff]
          %v1750 = vld [vmem:[%s501 + $0x50] sm:$0xff]
          %v1751 = vld [vmem:[%s501 + $0x58] sm:$0xff]
          %v1752 = vld [vmem:[%s501 + $0x60] sm:$0xff]
          %v1753 = vld [vmem:[%s501 + $0x68] sm:$0xff]
          %v1754 = vld [vmem:[%s501 + $0x70] sm:$0xff]
          %v1755 = vld [vmem:[%s501 + $0x78] sm:$0xff]
          %v1756 = vlaneseq
          %v1757 = vshrl.u32 %v1756, 7
          %v1758 = vsub.s32 4, %v1757
          %v1759 = vrot.slane %v558, %v1758
          %1760 = vmatprep.subr.mxu0 0.0
          %1761 = vmatpush1.msra.mxu0 %v1740
          %1762 = vmatprep.subr.mxu0 0.0
          %1763 = vmatpush1.msra.mxu0 %v1741
          %1764 = vmatprep.subr.mxu0 0.0
          %1765 = vmatpush1.msra.mxu0 %v1742
          %1766 = vmatprep.subr.mxu0 0.0
          %1767 = vmatpush1.msra.mxu0 %v1743
          %1768 = vmatprep.subr.mxu0 0.0
          %1769 = vmatpush1.msra.mxu0 %v1744
          %1770 = vmatprep.subr.mxu0 0.0
          %1771 = vmatpush1.msra.mxu0 %v1745
          %1772 = vmatprep.subr.mxu0 0.0
          %1773 = vmatpush1.msra.mxu0 %v1746
          %1774 = vmatprep.subr.mxu0 0.0
          %1775 = vmatpush1.msra.mxu0 %v1747
          %1776 = vmatprep.subr.mxu0 0.0
          %1777 = vmatpush1.msra.mxu0 %v1748
          %1778 = vmatprep.subr.mxu0 0.0
          %1779 = vmatpush1.msra.mxu0 %v1749
          %1780 = vmatprep.subr.mxu0 0.0
          %1781 = vmatpush1.msra.mxu0 %v1750
          %1782 = vmatprep.subr.mxu0 0.0
          %1783 = vmatpush1.msra.mxu0 %v1751
          %1784 = vmatprep.subr.mxu0 0.0
          %1785 = vmatpush1.msra.mxu0 %v1752
          %1786 = vmatprep.subr.mxu0 0.0
          %1787 = vmatpush1.msra.mxu0 %v1753
          %1788 = vmatprep.subr.mxu0 0.0
          %1789 = vmatpush1.msra.mxu0 %v1754
          %1790 = vmatprep.subr.mxu0 0.0
          %1791 = vmatpush1.msra.mxu0 %v1755
          %1792 = vmatprep.subr.mxu0 0.0
          %1793 = vmatpush1.msra.mxu0 0.0
          %1794 = vmatprep.subr.mxu0 0.0
          %1795 = vmatpush1.msra.mxu0 0.0
          %1796 = vmatprep.subr.mxu0 0.0
          %1797 = vmatpush1.msra.mxu0 0.0
          %1798 = vmatprep.subr.mxu0 0.0
          %1799 = vmatpush1.msra.mxu0 0.0
          %1800 = vmatprep.subr.mxu0 0.0
          %1801 = vmatpush1.msra.mxu0 0.0
          %1802 = vmatprep.subr.mxu0 0.0
          %1803 = vmatpush1.msra.mxu0 0.0
          %1804 = vmatprep.subr.mxu0 0.0
          %1805 = vmatpush1.msra.mxu0 0.0
          %1806 = vmatprep.subr.mxu0 0.0
          %1807 = vmatpush1.msra.mxu0 0.0
          %1808 = vmatprep.subr.mxu0 0.0
          %1809 = vmatpush1.msra.mxu0 0.0
          %1810 = vmatprep.subr.mxu0 0.0
          %1811 = vmatpush1.msra.mxu0 0.0
          %1812 = vmatprep.subr.mxu0 0.0
          %1813 = vmatpush1.msra.mxu0 0.0
          %1814 = vmatprep.subr.mxu0 0.0
          %1815 = vmatpush1.msra.mxu0 0.0
          %1816 = vmatprep.subr.mxu0 0.0
          %1817 = vmatpush1.msra.mxu0 0.0
          %1818 = vmatprep.subr.mxu0 0.0
          %1819 = vmatpush1.msra.mxu0 0.0
          %1820 = vmatprep.subr.mxu0 0.0
          %1821 = vmatpush1.msra.mxu0 0.0
          %1822 = vmatprep.subr.mxu0 0.0
          %1823 = vmatpush1.msra.mxu0 0.0
          %1824 = vmatprep.mubr.f32.mxu0 0.0
          %1825 = vmatmul.mubr.f32.gmra.mrb[0].mxu0 %v1737
          %v1826 = vpop.f32.mrb[0].mxu0
          %v1827 = vadd.f32 %v1759, %v1826
          %v1828 = vpop.f32.mrb[0].mxu0
          %1829 = vmatprep.mubr.f32.mxu0 0.0
          %1830 = vmatmul.mubr.f32.gmra.mrb[0].mxu0 %v1738
          %v1831 = vpop.f32.mrb[0].mxu0
          %v1832 = vadd.f32 %v1759, %v1831
          %v1833 = vpop.f32.mrb[0].mxu0
          %1834 = vmatprep.mubr.f32.mxu0 0.0
          %1835 = vmatmul.mubr.f32.gmra.mrb[0].mxu0 %v1739
          %v1836 = vpop.f32.mrb[0].mxu0
          %v1837 = vadd.f32 %v1759, %v1836
          %v1838 = vpop.f32.mrb[0].mxu0
          %1839 = vdwg.mxu0
          %v1840 = vmax.f32 %v1827, 0.0
          %v1841 = vmax.f32 %v1832, 0.0
          %v1842 = vmax.f32 %v1837, 0.0
          %v1843 = vld [vmem:[%s510] sm:$0xff]
          %v1844 = vld [vmem:[%s510 + $0x8] sm:$0xff]
          %v1845 = vld [vmem:[%s510 + $0x10] sm:$0xff]
          %v1846 = vld [vmem:[%s510 + $0x18] sm:$0xff]
          %v1847 = vld [vmem:[%s510 + $0x20] sm:$0xff]
          %v1848 = vld [vmem:[%s510 + $0x28] sm:$0xff]
          %v1849 = vld [vmem:[%s510 + $0x30] sm:$0xff]
          %v1850 = vld [vmem:[%s510 + $0x38] sm:$0xff]
          %v1851 = vld [vmem:[%s510 + $0x40] sm:$0xff]
          %v1852 = vld [vmem:[%s510 + $0x48] sm:$0xff]
          %v1853 = vld [vmem:[%s510 + $0x50] sm:$0xff]
          %v1854 = vld [vmem:[%s510 + $0x58] sm:$0xff]
          %v1855 = vld [vmem:[%s510 + $0x60] sm:$0xff]
          %v1856 = vld [vmem:[%s510 + $0x68] sm:$0xff]
          %v1857 = vld [vmem:[%s510 + $0x70] sm:$0xff]
          %v1858 = vld [vmem:[%s510 + $0x78] sm:$0xff]
          %v1859 = vlaneseq
          %v1860 = vshrl.u32 %v1859, 7
          %v1861 = vsub.s32 5, %v1860
          %v1862 = vrot.slane %v558, %v1861
          %1863 = vmatprep.subr.mxu0 0.0
          %1864 = vmatpush1.msra.mxu0 %v1843
          %1865 = vmatprep.subr.mxu0 0.0
          %1866 = vmatpush1.msra.mxu0 %v1844
          %1867 = vmatprep.subr.mxu0 0.0
          %1868 = vmatpush1.msra.mxu0 %v1845
          %1869 = vmatprep.subr.mxu0 0.0
          %1870 = vmatpush1.msra.mxu0 %v1846
          %1871 = vmatprep.subr.mxu0 0.0
          %1872 = vmatpush1.msra.mxu0 %v1847
          %1873 = vmatprep.subr.mxu0 0.0
          %1874 = vmatpush1.msra.mxu0 %v1848
          %1875 = vmatprep.subr.mxu0 0.0
          %1876 = vmatpush1.msra.mxu0 %v1849
          %1877 = vmatprep.subr.mxu0 0.0
          %1878 = vmatpush1.msra.mxu0 %v1850
          %1879 = vmatprep.subr.mxu0 0.0
          %1880 = vmatpush1.msra.mxu0 %v1851
          %1881 = vmatprep.subr.mxu0 0.0
          %1882 = vmatpush1.msra.mxu0 %v1852
          %1883 = vmatprep.subr.mxu0 0.0
          %1884 = vmatpush1.msra.mxu0 %v1853
          %1885 = vmatprep.subr.mxu0 0.0
          %1886 = vmatpush1.msra.mxu0 %v1854
          %1887 = vmatprep.subr.mxu0 0.0
          %1888 = vmatpush1.msra.mxu0 %v1855
          %1889 = vmatprep.subr.mxu0 0.0
          %1890 = vmatpush1.msra.mxu0 %v1856
          %1891 = vmatprep.subr.mxu0 0.0
          %1892 = vmatpush1.msra.mxu0 %v1857
          %1893 = vmatprep.subr.mxu0 0.0
          %1894 = vmatpush1.msra.mxu0 %v1858
          %1895 = vmatprep.subr.mxu0 0.0
          %1896 = vmatpush1.msra.mxu0 0.0
          %1897 = vmatprep.subr.mxu0 0.0
          %1898 = vmatpush1.msra.mxu0 0.0
          %1899 = vmatprep.subr.mxu0 0.0
          %1900 = vmatpush1.msra.mxu0 0.0
          %1901 = vmatprep.subr.mxu0 0.0
          %1902 = vmatpush1.msra.mxu0 0.0
          %1903 = vmatprep.subr.mxu0 0.0
          %1904 = vmatpush1.msra.mxu0 0.0
          %1905 = vmatprep.subr.mxu0 0.0
          %1906 = vmatpush1.msra.mxu0 0.0
          %1907 = vmatprep.subr.mxu0 0.0
          %1908 = vmatpush1.msra.mxu0 0.0
          %1909 = vmatprep.subr.mxu0 0.0
          %1910 = vmatpush1.msra.mxu0 0.0
          %1911 = vmatprep.subr.mxu0 0.0
          %1912 = vmatpush1.msra.mxu0 0.0
          %1913 = vmatprep.subr.mxu0 0.0
          %1914 = vmatpush1.msra.mxu0 0.0
          %1915 = vmatprep.subr.mxu0 0.0
          %1916 = vmatpush1.msra.mxu0 0.0
          %1917 = vmatprep.subr.mxu0 0.0
          %1918 = vmatpush1.msra.mxu0 0.0
          %1919 = vmatprep.subr.mxu0 0.0
          %1920 = vmatpush1.msra.mxu0 0.0
          %1921 = vmatprep.subr.mxu0 0.0
          %1922 = vmatpush1.msra.mxu0 0.0
          %1923 = vmatprep.subr.mxu0 0.0
          %1924 = vmatpush1.msra.mxu0 0.0
          %1925 = vmatprep.subr.mxu0 0.0
          %1926 = vmatpush1.msra.mxu0 0.0
          %1927 = vmatprep.mubr.f32.mxu0 0.0
          %1928 = vmatmul.mubr.f32.gmra.mrb[0].mxu0 %v1840
          %v1929 = vpop.f32.mrb[0].mxu0
          %v1930 = vadd.f32 %v1862, %v1929
          %v1931 = vpop.f32.mrb[0].mxu0
          %1932 = vmatprep.mubr.f32.mxu0 0.0
          %1933 = vmatmul.mubr.f32.gmra.mrb[0].mxu0 %v1841
          %v1934 = vpop.f32.mrb[0].mxu0
          %v1935 = vadd.f32 %v1862, %v1934
          %v1936 = vpop.f32.mrb[0].mxu0
          %1937 = vmatprep.mubr.f32.mxu0 0.0
          %1938 = vmatmul.mubr.f32.gmra.mrb[0].mxu0 %v1842
          %v1939 = vpop.f32.mrb[0].mxu0
          %v1940 = vadd.f32 %v1862, %v1939
          %v1941 = vpop.f32.mrb[0].mxu0
          %1942 = vdwg.mxu0
          %v1943 = vld [vmem:[#allocation22] sm:$0xff]
          %v1944 = vld [vmem:[#allocation22 + $0x8] sm:$0xff]
          %v1945 = vld [vmem:[#allocation22 + $0x10] sm:$0xff]
          %v1946 = vadd.f32 %v1943, %v1930
          %v1947 = vadd.f32 %v1944, %v1935
          %v1948 = vadd.f32 %v1945, %v1940
          %1949 = vst [vmem:[#allocation22] sm:$0xff] %v1946
          %1950 = vst [vmem:[#allocation22 + $0x8] sm:$0xff] %v1947
          %1951 = vst [vmem:[#allocation22 + $0x10] sm:$0xff] %v1948
        $region108: #{tpu_custom_call.1} parent=55 // pred_fallthru
          _
        // Predicated region
        $region109: #{tpu_custom_call.1} parent=55 // pred_check
          %p1952 = pneg %p276
        $region110: #{tpu_custom_call.1} parent=55 // pred_check_branch
          %1954 = sbr.rel (%p1952) target = $region112
        $region111: #{tpu_custom_call.1} parent=55 // pred_region
          %s1956 = ssub.s32 384, 384
          %1957 = vsyncadd [#allocation9], %s1956
          %s1958 = sshll.u32 [#allocation22], 4
          %s1959 = int_to_ptr.vmem [resolvable:$true] %s1958
          %1964 = dma.vmem_to_hbm [thread:$0]  %s1959, 384, %s9, [#allocation9], 128, 128, 8
        $region112: #{tpu_custom_call.1} parent=55 // pred_fallthru
          _
        // Predicated region
        $region113: #{tpu_custom_call.1} parent=55 // pred_check
          %p1965 = pneg %p276
        $region114: #{tpu_custom_call.1} parent=55 // pred_check_branch
          %1967 = sbr.rel (%p1965) target = $region116
        $region115: #{tpu_custom_call.1} parent=55 // pred_region
          %1968 = dma.done [#allocation9], 384
        $region116: #{tpu_custom_call.1} parent=55 // pred_fallthru
          _
      $region56: #{tpu_custom_call.1} parent=5 // pred_fallthru
        _
      %p1969 = scmp.le.s32.totalorder 2, %s25
      // Predicated region
      $region117: #{tpu_custom_call.1} parent=5 // pred_check
        %p1970 = pneg %p1969
      $region118: #{tpu_custom_call.1} parent=5 // pred_check_branch
        %1972 = sbr.rel (%p1970) target = $region120
      $region119: #{tpu_custom_call.1} parent=5 // pred_region
        %s1973 = ssub.s32 %s25, 2
      $region120: #{tpu_custom_call.1} parent=5 // pred_fallthru
        _
    $region6: #{tpu_custom_call.1} parent=1 // loop_footer
      %s29 = sadd.s32 1, %s25
    $region7: #{tpu_custom_call.1} parent=1 // loop_footer_branch
      %24 = sbr.rel target = $region3
    $region8: #{tpu_custom_call.1} parent=1 // loop_exit
      _
    %1974 = vsyncpa [#allocation8], 1
    %s1975 = scalar_lea.sflag [#allocation8], 1
    %1976 = vsyncpa %s1975, 1
    %1977 = vsyncpa [#allocation11], 1
    %1978 = vsyncpa [#allocation14], 1
    %s1979 = scalar_lea.sflag [#allocation14], 1
    %1980 = vsyncpa %s1979, 1
    %1981 = vsyncpa [#allocation17], 1
    %1982 = vsyncpa [#allocation20], 1
    %s1983 = scalar_lea.sflag [#allocation20], 1
    %1984 = vsyncpa %s1983, 1
    %1985 = vsyncpa [#allocation9], 1
    %s1986 = scalar_lea.sflag [#allocation9], 1
    %1987 = vsyncpa %s1986, 1

</llo_original>
